<compile_context>
chip_gen: v7x
topology: tpu7x:2x2x1
jax: 0.10.0
libtpu: 0.0.40
codegen_flags: <defaults>
</compile_context>

<pallas_src>
import jax
import jax.numpy as jnp
from jax import lax
from jax.experimental import pallas as pl
from jax.experimental.pallas import tpu as pltpu

# --- dims implied by the module (flatten must give 12 = 3 ch * 2 * 2  =>  10x10 input) ---
B = 2            # batch
H = W = 10       # input spatial
C1, K1 = 6, 4    # conv1: 6 out channels, 4x4 kernel  -> 7x7
C2, K2 = 3, 2    # conv2: 3 out channels, 2x2 kernel  -> 2x2 (after 2x2 maxpool: 7 -> 3)
H1 = H - K1 + 1          # 7
HP = H1 // 2             # 3   (floor, PyTorch max_pool2d default)
H2 = HP - K2 + 1         # 2
NFLAT = C2 * H2 * H2     # 12
NOUT = 10
CMW = C1 * HP * (H1 - 1)  # 108: width of the lane-packed pooled/im2col matrix (<=128: 1 MXU pass on v5e)

# row offsets inside the packed (128, 12) constant buffer
PK_W2E = 0                # rows   0..107 : scattered conv2 weights (108, 12)
PK_B2 = CMW               # row    108    : conv2 bias broadcast to 12 lanes
PK_FCW = 112              # rows 112..123 : fc weight^T (12, 10), lanes 10..11 zero
PK_FCB = PK_FCW + NFLAT   # row    124    : fc bias (10,), lanes 10..11 zero
PK_ROWS = 128


def classical_net_kernel(x_ref, w1b1_ref, pk_ref, out_ref):
    # ---- conv1 (VALID 4x4): per-ki window groups -> <=4 windows + 6 accumulators live ----
    acc = [None] * C1
    for ki in range(K1):
        rw = [x_ref[:, ki:ki + H1, kj:kj + H1] for kj in range(K1)]    # 4 x (B,7,7)
        for c in range(C1):
            for kj in range(K1):
                t = rw[kj] * w1b1_ref[c * K1 * K1 + ki * K1 + kj]
                acc[c] = t if acc[c] is None else acc[c] + t

    # ---- bias + ReLU + in-register 2x2/2 maxpool (shift+max, pick even rows) ----
    cms = []
    for c in range(C1):
        h = jnp.maximum(acc[c] + w1b1_ref[C1 * K1 * K1 + c], 0.0)      # (B,7,7)
        rmax = jnp.maximum(h[:, 0:H1 - 1, :], h[:, 1:H1, :])           # (B,6,7)
        cmax = jnp.maximum(rmax[:, :, 0:H1 - 1], rmax[:, :, 1:H1])     # (B,6,6)
        for i in range(HP):
            # pooled row i lives at even lanes 0,2,4; odd lanes are junk (zero weight below)
            cms.append(cmax[:, 2 * i, :])                              # (B,6)
    cm = jnp.concatenate(cms, axis=1)                                  # (B,108), lane-dense

    # ---- conv2 + bias + ReLU as one MXU dot (weights pre-scattered host-side) ----
    flat = jnp.maximum(
        jnp.dot(cm, pk_ref[PK_W2E:PK_W2E + CMW, :],
                preferred_element_type=jnp.float32)
        + pk_ref[PK_B2:PK_B2 + 1, :],
        0.0)                                                           # (B,12), PyTorch view order

    # ---- fc1 as a second tiny MXU dot + bias (no serial VPU chain in the tail) ----
    logits = (jnp.dot(flat, pk_ref[PK_FCW:PK_FCW + NFLAT, 0:NOUT],
                      preferred_element_type=jnp.float32)
              + pk_ref[PK_FCB:PK_FCB + 1, 0:NOUT])                     # (B,10)

    # ---- softmax over classes ----
    mx = jnp.max(logits, axis=1, keepdims=True)
    e = jnp.exp(logits - mx)
    s = jnp.sum(e, axis=1, keepdims=True)
    out_ref[...] = e * pl.reciprocal(s, approx=True)


def build_w2eff(w2):
    """Scatter conv2 weights into a (108, 12) dense matrix acting on the lane-packed
    pooled matrix cm, so conv2 becomes cm @ w2eff.  Row layout of cm:
    column (cin*3 + pi)*6 + 2*pj holds pooled[cin, pi, pj]; odd offsets are junk -> 0."""
    rows, cols, widx = [], [], []
    for cin in range(C1):
        for pi in range(HP):
            for pj in range(HP):
                r = (cin * HP + pi) * (H1 - 1) + 2 * pj
                for c2 in range(C2):
                    for oi in range(H2):
                        for oj in range(H2):
                            ki, kj = pi - oi, pj - oj
                            if 0 <= ki < K2 and 0 <= kj < K2:
                                rows.append(r)
                                cols.append(c2 * H2 * H2 + oi * H2 + oj)
                                widx.append((c2, cin, ki, kj))
    widx = jnp.array(widx, jnp.int32)
    vals = w2[widx[:, 0], widx[:, 1], widx[:, 2], widx[:, 3]].astype(jnp.float32)
    w2e = jnp.zeros((CMW, NFLAT), jnp.float32)
    return w2e.at[jnp.array(rows, jnp.int32), jnp.array(cols, jnp.int32)].set(vals)


def classical_net_forward(x_nchw, params):
    w1, b1, w2, b2, fcw, fcb = params
    x = x_nchw[:, 0, :, :].astype(jnp.float32)                         # (B, H, W)

    # 1D SMEM buffer: conv1 weights (c*16 + ki*4 + kj) then conv1 bias (96 + c)
    w1b1 = jnp.concatenate([w1.reshape(-1), b1.reshape(-1)]).astype(jnp.float32)   # (102,)

    # single packed VMEM constant buffer (128, 12)
    w2e = build_w2eff(w2.astype(jnp.float32))                          # (108, 12)
    b2row = jnp.repeat(b2.astype(jnp.float32), H2 * H2)                # (12,)
    packed = jnp.zeros((PK_ROWS, NFLAT), jnp.float32)
    packed = packed.at[PK_W2E:PK_W2E + CMW, :].set(w2e)
    packed = packed.at[PK_B2, :].set(b2row)
    packed = packed.at[PK_FCW:PK_FCW + NFLAT, 0:NOUT].set(fcw.T.astype(jnp.float32))
    packed = packed.at[PK_FCB, 0:NOUT].set(fcb.astype(jnp.float32))

    return pl.pallas_call(
        classical_net_kernel,
        out_shape=jax.ShapeDtypeStruct((B, NOUT), jnp.float32),
        in_specs=[
            pl.BlockSpec(memory_space=pltpu.MemorySpace.VMEM),   # x (B, 10, 10)
            pl.BlockSpec(memory_space=pltpu.MemorySpace.SMEM),   # conv1 weight+bias (102,)
            pl.BlockSpec(memory_space=pltpu.MemorySpace.VMEM),   # packed constants (128, 12)
        ],
        out_specs=pl.BlockSpec(memory_space=pltpu.MemorySpace.VMEM),
    )(x, w1b1, packed)


def reference_forward(x, params):
    """Pure-JAX reference matching the PyTorch forward."""
    w1, b1, w2, b2, fcw, fcb = params
    dn = ('NCHW', 'OIHW', 'NCHW')
    h = lax.conv_general_dilated(x, w1, (1, 1), 'VALID', dimension_numbers=dn,
                                 precision=lax.Precision.HIGHEST)
    h = jax.nn.relu(h + b1[None, :, None, None])
    h = lax.reduce_window(h, -jnp.inf, lax.max, (1, 1, 2, 2), (1, 1, 2, 2), 'VALID')
    h = lax.conv_general_dilated(h, w2, (1, 1), 'VALID', dimension_numbers=dn,
                                 precision=lax.Precision.HIGHEST)
    h = jax.nn.relu(h + b2[None, :, None, None])
    h = h.reshape(h.shape[0], -1)
    logits = jnp.dot(h, fcw.T, precision=lax.Precision.HIGHEST) + fcb
    return jax.nn.softmax(logits, axis=1)


def init_params(key):
    """Deterministic init mimicking PyTorch default U(-1/sqrt(fan_in), 1/sqrt(fan_in))."""
    ks = jax.random.split(key, 6)

    def u(k, shape, fan_in):
        bound = 1.0 / (fan_in ** 0.5)
        return jax.random.uniform(k, shape, jnp.float32, -bound, bound)

    w1 = u(ks[0], (C1, 1, K1, K1), 1 * K1 * K1)
    b1 = u(ks[1], (C1,), 1 * K1 * K1)
    w2 = u(ks[2], (C2, C1, K2, K2), C1 * K2 * K2)
    b2 = u(ks[3], (C2,), C1 * K2 * K2)
    fcw = u(ks[4], (NOUT, NFLAT), NFLAT)
    fcb = u(ks[5], (NOUT,), NFLAT)
    return w1, b1, w2, b2, fcw, fcb


if __name__ == "__main__":
    key = jax.random.PRNGKey(0)
    pkey, xkey = jax.random.split(key)
    params = init_params(pkey)
    x = jax.random.normal(xkey, (B, 1, H, W), jnp.float32)   # NCHW, single channel

    out = classical_net_forward(x, params)
    out = jax.block_until_ready(out)

    ref = reference_forward(x, params)
    assert out.shape == (B, NOUT)
    assert bool(jnp.all(jnp.isfinite(out)))
    assert jnp.allclose(out, ref, atol=1e-3, rtol=1e-3), (out, ref)
    print("KERNEL_OK")
</pallas_src>

<mosaic_0001>
module attributes {stable_mosaic.version = 11 : i64} {
  func.func @classical_net_kernel(%arg0: memref<2x10x10xf32, #tpu.memory_space<vmem>>, %arg1: memref<102xf32, #tpu.memory_space<smem>>, %arg2: memref<128x12xf32, #tpu.memory_space<vmem>>, %arg3: memref<2x10xf32, #tpu.memory_space<vmem>>) attributes {dimension_semantics = [], scalar_prefetch = 0 : i64, scratch_operands = 0 : i64, tpu.core_type = #tpu.core_type<tc>} {
    %c0 = arith.constant 0 : index
    %c0_0 = arith.constant 0 : index
    %c0_1 = arith.constant 0 : index
    %0 = vector.load %arg0[%c0, %c0_0, %c0_1] : memref<2x10x10xf32, #tpu.memory_space<vmem>>, vector<2x7x7xf32>
    %c0_2 = arith.constant 0 : index
    %c0_3 = arith.constant 0 : index
    %c1 = arith.constant 1 : index
    %1 = vector.load %arg0[%c0_2, %c0_3, %c1] : memref<2x10x10xf32, #tpu.memory_space<vmem>>, vector<2x7x7xf32>
    %c0_4 = arith.constant 0 : index
    %c0_5 = arith.constant 0 : index
    %c2 = arith.constant 2 : index
    %2 = vector.load %arg0[%c0_4, %c0_5, %c2] : memref<2x10x10xf32, #tpu.memory_space<vmem>>, vector<2x7x7xf32>
    %c0_6 = arith.constant 0 : index
    %c0_7 = arith.constant 0 : index
    %c3 = arith.constant 3 : index
    %3 = vector.load %arg0[%c0_6, %c0_7, %c3] : memref<2x10x10xf32, #tpu.memory_space<vmem>>, vector<2x7x7xf32>
    %c0_8 = arith.constant 0 : index
    %4 = memref.load %arg1[%c0_8] : memref<102xf32, #tpu.memory_space<smem>>
    %5 = vector.broadcast %4 : f32 to vector<2x7x7xf32>
    %6 = arith.mulf %0, %5 : vector<2x7x7xf32>
    %c1_9 = arith.constant 1 : index
    %7 = memref.load %arg1[%c1_9] : memref<102xf32, #tpu.memory_space<smem>>
    %8 = vector.broadcast %7 : f32 to vector<2x7x7xf32>
    %9 = arith.mulf %1, %8 : vector<2x7x7xf32>
    %10 = arith.addf %6, %9 : vector<2x7x7xf32>
    %c2_10 = arith.constant 2 : index
    %11 = memref.load %arg1[%c2_10] : memref<102xf32, #tpu.memory_space<smem>>
    %12 = vector.broadcast %11 : f32 to vector<2x7x7xf32>
    %13 = arith.mulf %2, %12 : vector<2x7x7xf32>
    %14 = arith.addf %10, %13 : vector<2x7x7xf32>
    %c3_11 = arith.constant 3 : index
    %15 = memref.load %arg1[%c3_11] : memref<102xf32, #tpu.memory_space<smem>>
    %16 = vector.broadcast %15 : f32 to vector<2x7x7xf32>
    %17 = arith.mulf %3, %16 : vector<2x7x7xf32>
    %18 = arith.addf %14, %17 : vector<2x7x7xf32>
    %c16 = arith.constant 16 : index
    %19 = memref.load %arg1[%c16] : memref<102xf32, #tpu.memory_space<smem>>
    %20 = vector.broadcast %19 : f32 to vector<2x7x7xf32>
    %21 = arith.mulf %0, %20 : vector<2x7x7xf32>
    %c17 = arith.constant 17 : index
    %22 = memref.load %arg1[%c17] : memref<102xf32, #tpu.memory_space<smem>>
    %23 = vector.broadcast %22 : f32 to vector<2x7x7xf32>
    %24 = arith.mulf %1, %23 : vector<2x7x7xf32>
    %25 = arith.addf %21, %24 : vector<2x7x7xf32>
    %c18 = arith.constant 18 : index
    %26 = memref.load %arg1[%c18] : memref<102xf32, #tpu.memory_space<smem>>
    %27 = vector.broadcast %26 : f32 to vector<2x7x7xf32>
    %28 = arith.mulf %2, %27 : vector<2x7x7xf32>
    %29 = arith.addf %25, %28 : vector<2x7x7xf32>
    %c19 = arith.constant 19 : index
    %30 = memref.load %arg1[%c19] : memref<102xf32, #tpu.memory_space<smem>>
    %31 = vector.broadcast %30 : f32 to vector<2x7x7xf32>
    %32 = arith.mulf %3, %31 : vector<2x7x7xf32>
    %33 = arith.addf %29, %32 : vector<2x7x7xf32>
    %c32 = arith.constant 32 : index
    %34 = memref.load %arg1[%c32] : memref<102xf32, #tpu.memory_space<smem>>
    %35 = vector.broadcast %34 : f32 to vector<2x7x7xf32>
    %36 = arith.mulf %0, %35 : vector<2x7x7xf32>
    %c33 = arith.constant 33 : index
    %37 = memref.load %arg1[%c33] : memref<102xf32, #tpu.memory_space<smem>>
    %38 = vector.broadcast %37 : f32 to vector<2x7x7xf32>
    %39 = arith.mulf %1, %38 : vector<2x7x7xf32>
    %40 = arith.addf %36, %39 : vector<2x7x7xf32>
    %c34 = arith.constant 34 : index
    %41 = memref.load %arg1[%c34] : memref<102xf32, #tpu.memory_space<smem>>
    %42 = vector.broadcast %41 : f32 to vector<2x7x7xf32>
    %43 = arith.mulf %2, %42 : vector<2x7x7xf32>
    %44 = arith.addf %40, %43 : vector<2x7x7xf32>
    %c35 = arith.constant 35 : index
    %45 = memref.load %arg1[%c35] : memref<102xf32, #tpu.memory_space<smem>>
    %46 = vector.broadcast %45 : f32 to vector<2x7x7xf32>
    %47 = arith.mulf %3, %46 : vector<2x7x7xf32>
    %48 = arith.addf %44, %47 : vector<2x7x7xf32>
    %c48 = arith.constant 48 : index
    %49 = memref.load %arg1[%c48] : memref<102xf32, #tpu.memory_space<smem>>
    %50 = vector.broadcast %49 : f32 to vector<2x7x7xf32>
    %51 = arith.mulf %0, %50 : vector<2x7x7xf32>
    %c49 = arith.constant 49 : index
    %52 = memref.load %arg1[%c49] : memref<102xf32, #tpu.memory_space<smem>>
    %53 = vector.broadcast %52 : f32 to vector<2x7x7xf32>
    %54 = arith.mulf %1, %53 : vector<2x7x7xf32>
    %55 = arith.addf %51, %54 : vector<2x7x7xf32>
    %c50 = arith.constant 50 : index
    %56 = memref.load %arg1[%c50] : memref<102xf32, #tpu.memory_space<smem>>
    %57 = vector.broadcast %56 : f32 to vector<2x7x7xf32>
    %58 = arith.mulf %2, %57 : vector<2x7x7xf32>
    %59 = arith.addf %55, %58 : vector<2x7x7xf32>
    %c51 = arith.constant 51 : index
    %60 = memref.load %arg1[%c51] : memref<102xf32, #tpu.memory_space<smem>>
    %61 = vector.broadcast %60 : f32 to vector<2x7x7xf32>
    %62 = arith.mulf %3, %61 : vector<2x7x7xf32>
    %63 = arith.addf %59, %62 : vector<2x7x7xf32>
    %c64 = arith.constant 64 : index
    %64 = memref.load %arg1[%c64] : memref<102xf32, #tpu.memory_space<smem>>
    %65 = vector.broadcast %64 : f32 to vector<2x7x7xf32>
    %66 = arith.mulf %0, %65 : vector<2x7x7xf32>
    %c65 = arith.constant 65 : index
    %67 = memref.load %arg1[%c65] : memref<102xf32, #tpu.memory_space<smem>>
    %68 = vector.broadcast %67 : f32 to vector<2x7x7xf32>
    %69 = arith.mulf %1, %68 : vector<2x7x7xf32>
    %70 = arith.addf %66, %69 : vector<2x7x7xf32>
    %c66 = arith.constant 66 : index
    %71 = memref.load %arg1[%c66] : memref<102xf32, #tpu.memory_space<smem>>
    %72 = vector.broadcast %71 : f32 to vector<2x7x7xf32>
    %73 = arith.mulf %2, %72 : vector<2x7x7xf32>
    %74 = arith.addf %70, %73 : vector<2x7x7xf32>
    %c67 = arith.constant 67 : index
    %75 = memref.load %arg1[%c67] : memref<102xf32, #tpu.memory_space<smem>>
    %76 = vector.broadcast %75 : f32 to vector<2x7x7xf32>
    %77 = arith.mulf %3, %76 : vector<2x7x7xf32>
    %78 = arith.addf %74, %77 : vector<2x7x7xf32>
    %c80 = arith.constant 80 : index
    %79 = memref.load %arg1[%c80] : memref<102xf32, #tpu.memory_space<smem>>
    %80 = vector.broadcast %79 : f32 to vector<2x7x7xf32>
    %81 = arith.mulf %0, %80 : vector<2x7x7xf32>
    %c81 = arith.constant 81 : index
    %82 = memref.load %arg1[%c81] : memref<102xf32, #tpu.memory_space<smem>>
    %83 = vector.broadcast %82 : f32 to vector<2x7x7xf32>
    %84 = arith.mulf %1, %83 : vector<2x7x7xf32>
    %85 = arith.addf %81, %84 : vector<2x7x7xf32>
    %c82 = arith.constant 82 : index
    %86 = memref.load %arg1[%c82] : memref<102xf32, #tpu.memory_space<smem>>
    %87 = vector.broadcast %86 : f32 to vector<2x7x7xf32>
    %88 = arith.mulf %2, %87 : vector<2x7x7xf32>
    %89 = arith.addf %85, %88 : vector<2x7x7xf32>
    %c83 = arith.constant 83 : index
    %90 = memref.load %arg1[%c83] : memref<102xf32, #tpu.memory_space<smem>>
    %91 = vector.broadcast %90 : f32 to vector<2x7x7xf32>
    %92 = arith.mulf %3, %91 : vector<2x7x7xf32>
    %93 = arith.addf %89, %92 : vector<2x7x7xf32>
    %c0_12 = arith.constant 0 : index
    %c1_13 = arith.constant 1 : index
    %c0_14 = arith.constant 0 : index
    %94 = vector.load %arg0[%c0_12, %c1_13, %c0_14] : memref<2x10x10xf32, #tpu.memory_space<vmem>>, vector<2x7x7xf32>
    %c0_15 = arith.constant 0 : index
    %c1_16 = arith.constant 1 : index
    %c1_17 = arith.constant 1 : index
    %95 = vector.load %arg0[%c0_15, %c1_16, %c1_17] : memref<2x10x10xf32, #tpu.memory_space<vmem>>, vector<2x7x7xf32>
    %c0_18 = arith.constant 0 : index
    %c1_19 = arith.constant 1 : index
    %c2_20 = arith.constant 2 : index
    %96 = vector.load %arg0[%c0_18, %c1_19, %c2_20] : memref<2x10x10xf32, #tpu.memory_space<vmem>>, vector<2x7x7xf32>
    %c0_21 = arith.constant 0 : index
    %c1_22 = arith.constant 1 : index
    %c3_23 = arith.constant 3 : index
    %97 = vector.load %arg0[%c0_21, %c1_22, %c3_23] : memref<2x10x10xf32, #tpu.memory_space<vmem>>, vector<2x7x7xf32>
    %c4 = arith.constant 4 : index
    %98 = memref.load %arg1[%c4] : memref<102xf32, #tpu.memory_space<smem>>
    %99 = vector.broadcast %98 : f32 to vector<2x7x7xf32>
    %100 = arith.mulf %94, %99 : vector<2x7x7xf32>
    %101 = arith.addf %18, %100 : vector<2x7x7xf32>
    %c5 = arith.constant 5 : index
    %102 = memref.load %arg1[%c5] : memref<102xf32, #tpu.memory_space<smem>>
    %103 = vector.broadcast %102 : f32 to vector<2x7x7xf32>
    %104 = arith.mulf %95, %103 : vector<2x7x7xf32>
    %105 = arith.addf %101, %104 : vector<2x7x7xf32>
    %c6 = arith.constant 6 : index
    %106 = memref.load %arg1[%c6] : memref<102xf32, #tpu.memory_space<smem>>
    %107 = vector.broadcast %106 : f32 to vector<2x7x7xf32>
    %108 = arith.mulf %96, %107 : vector<2x7x7xf32>
    %109 = arith.addf %105, %108 : vector<2x7x7xf32>
    %c7 = arith.constant 7 : index
    %110 = memref.load %arg1[%c7] : memref<102xf32, #tpu.memory_space<smem>>
    %111 = vector.broadcast %110 : f32 to vector<2x7x7xf32>
    %112 = arith.mulf %97, %111 : vector<2x7x7xf32>
    %113 = arith.addf %109, %112 : vector<2x7x7xf32>
    %c20 = arith.constant 20 : index
    %114 = memref.load %arg1[%c20] : memref<102xf32, #tpu.memory_space<smem>>
    %115 = vector.broadcast %114 : f32 to vector<2x7x7xf32>
    %116 = arith.mulf %94, %115 : vector<2x7x7xf32>
    %117 = arith.addf %33, %116 : vector<2x7x7xf32>
    %c21 = arith.constant 21 : index
    %118 = memref.load %arg1[%c21] : memref<102xf32, #tpu.memory_space<smem>>
    %119 = vector.broadcast %118 : f32 to vector<2x7x7xf32>
    %120 = arith.mulf %95, %119 : vector<2x7x7xf32>
    %121 = arith.addf %117, %120 : vector<2x7x7xf32>
    %c22 = arith.constant 22 : index
    %122 = memref.load %arg1[%c22] : memref<102xf32, #tpu.memory_space<smem>>
    %123 = vector.broadcast %122 : f32 to vector<2x7x7xf32>
    %124 = arith.mulf %96, %123 : vector<2x7x7xf32>
    %125 = arith.addf %121, %124 : vector<2x7x7xf32>
    %c23 = arith.constant 23 : index
    %126 = memref.load %arg1[%c23] : memref<102xf32, #tpu.memory_space<smem>>
    %127 = vector.broadcast %126 : f32 to vector<2x7x7xf32>
    %128 = arith.mulf %97, %127 : vector<2x7x7xf32>
    %129 = arith.addf %125, %128 : vector<2x7x7xf32>
    %c36 = arith.constant 36 : index
    %130 = memref.load %arg1[%c36] : memref<102xf32, #tpu.memory_space<smem>>
    %131 = vector.broadcast %130 : f32 to vector<2x7x7xf32>
    %132 = arith.mulf %94, %131 : vector<2x7x7xf32>
    %133 = arith.addf %48, %132 : vector<2x7x7xf32>
    %c37 = arith.constant 37 : index
    %134 = memref.load %arg1[%c37] : memref<102xf32, #tpu.memory_space<smem>>
    %135 = vector.broadcast %134 : f32 to vector<2x7x7xf32>
    %136 = arith.mulf %95, %135 : vector<2x7x7xf32>
    %137 = arith.addf %133, %136 : vector<2x7x7xf32>
    %c38 = arith.constant 38 : index
    %138 = memref.load %arg1[%c38] : memref<102xf32, #tpu.memory_space<smem>>
    %139 = vector.broadcast %138 : f32 to vector<2x7x7xf32>
    %140 = arith.mulf %96, %139 : vector<2x7x7xf32>
    %141 = arith.addf %137, %140 : vector<2x7x7xf32>
    %c39 = arith.constant 39 : index
    %142 = memref.load %arg1[%c39] : memref<102xf32, #tpu.memory_space<smem>>
    %143 = vector.broadcast %142 : f32 to vector<2x7x7xf32>
    %144 = arith.mulf %97, %143 : vector<2x7x7xf32>
    %145 = arith.addf %141, %144 : vector<2x7x7xf32>
    %c52 = arith.constant 52 : index
    %146 = memref.load %arg1[%c52] : memref<102xf32, #tpu.memory_space<smem>>
    %147 = vector.broadcast %146 : f32 to vector<2x7x7xf32>
    %148 = arith.mulf %94, %147 : vector<2x7x7xf32>
    %149 = arith.addf %63, %148 : vector<2x7x7xf32>
    %c53 = arith.constant 53 : index
    %150 = memref.load %arg1[%c53] : memref<102xf32, #tpu.memory_space<smem>>
    %151 = vector.broadcast %150 : f32 to vector<2x7x7xf32>
    %152 = arith.mulf %95, %151 : vector<2x7x7xf32>
    %153 = arith.addf %149, %152 : vector<2x7x7xf32>
    %c54 = arith.constant 54 : index
    %154 = memref.load %arg1[%c54] : memref<102xf32, #tpu.memory_space<smem>>
    %155 = vector.broadcast %154 : f32 to vector<2x7x7xf32>
    %156 = arith.mulf %96, %155 : vector<2x7x7xf32>
    %157 = arith.addf %153, %156 : vector<2x7x7xf32>
    %c55 = arith.constant 55 : index
    %158 = memref.load %arg1[%c55] : memref<102xf32, #tpu.memory_space<smem>>
    %159 = vector.broadcast %158 : f32 to vector<2x7x7xf32>
    %160 = arith.mulf %97, %159 : vector<2x7x7xf32>
    %161 = arith.addf %157, %160 : vector<2x7x7xf32>
    %c68 = arith.constant 68 : index
    %162 = memref.load %arg1[%c68] : memref<102xf32, #tpu.memory_space<smem>>
    %163 = vector.broadcast %162 : f32 to vector<2x7x7xf32>
    %164 = arith.mulf %94, %163 : vector<2x7x7xf32>
    %165 = arith.addf %78, %164 : vector<2x7x7xf32>
    %c69 = arith.constant 69 : index
    %166 = memref.load %arg1[%c69] : memref<102xf32, #tpu.memory_space<smem>>
    %167 = vector.broadcast %166 : f32 to vector<2x7x7xf32>
    %168 = arith.mulf %95, %167 : vector<2x7x7xf32>
    %169 = arith.addf %165, %168 : vector<2x7x7xf32>
    %c70 = arith.constant 70 : index
    %170 = memref.load %arg1[%c70] : memref<102xf32, #tpu.memory_space<smem>>
    %171 = vector.broadcast %170 : f32 to vector<2x7x7xf32>
    %172 = arith.mulf %96, %171 : vector<2x7x7xf32>
    %173 = arith.addf %169, %172 : vector<2x7x7xf32>
    %c71 = arith.constant 71 : index
    %174 = memref.load %arg1[%c71] : memref<102xf32, #tpu.memory_space<smem>>
    %175 = vector.broadcast %174 : f32 to vector<2x7x7xf32>
    %176 = arith.mulf %97, %175 : vector<2x7x7xf32>
    %177 = arith.addf %173, %176 : vector<2x7x7xf32>
    %c84 = arith.constant 84 : index
    %178 = memref.load %arg1[%c84] : memref<102xf32, #tpu.memory_space<smem>>
    %179 = vector.broadcast %178 : f32 to vector<2x7x7xf32>
    %180 = arith.mulf %94, %179 : vector<2x7x7xf32>
    %181 = arith.addf %93, %180 : vector<2x7x7xf32>
    %c85 = arith.constant 85 : index
    %182 = memref.load %arg1[%c85] : memref<102xf32, #tpu.memory_space<smem>>
    %183 = vector.broadcast %182 : f32 to vector<2x7x7xf32>
    %184 = arith.mulf %95, %183 : vector<2x7x7xf32>
    %185 = arith.addf %181, %184 : vector<2x7x7xf32>
    %c86 = arith.constant 86 : index
    %186 = memref.load %arg1[%c86] : memref<102xf32, #tpu.memory_space<smem>>
    %187 = vector.broadcast %186 : f32 to vector<2x7x7xf32>
    %188 = arith.mulf %96, %187 : vector<2x7x7xf32>
    %189 = arith.addf %185, %188 : vector<2x7x7xf32>
    %c87 = arith.constant 87 : index
    %190 = memref.load %arg1[%c87] : memref<102xf32, #tpu.memory_space<smem>>
    %191 = vector.broadcast %190 : f32 to vector<2x7x7xf32>
    %192 = arith.mulf %97, %191 : vector<2x7x7xf32>
    %193 = arith.addf %189, %192 : vector<2x7x7xf32>
    %c0_24 = arith.constant 0 : index
    %c2_25 = arith.constant 2 : index
    %c0_26 = arith.constant 0 : index
    %194 = vector.load %arg0[%c0_24, %c2_25, %c0_26] : memref<2x10x10xf32, #tpu.memory_space<vmem>>, vector<2x7x7xf32>
    %c0_27 = arith.constant 0 : index
    %c2_28 = arith.constant 2 : index
    %c1_29 = arith.constant 1 : index
    %195 = vector.load %arg0[%c0_27, %c2_28, %c1_29] : memref<2x10x10xf32, #tpu.memory_space<vmem>>, vector<2x7x7xf32>
    %c0_30 = arith.constant 0 : index
    %c2_31 = arith.constant 2 : index
    %c2_32 = arith.constant 2 : index
    %196 = vector.load %arg0[%c0_30, %c2_31, %c2_32] : memref<2x10x10xf32, #tpu.memory_space<vmem>>, vector<2x7x7xf32>
    %c0_33 = arith.constant 0 : index
    %c2_34 = arith.constant 2 : index
    %c3_35 = arith.constant 3 : index
    %197 = vector.load %arg0[%c0_33, %c2_34, %c3_35] : memref<2x10x10xf32, #tpu.memory_space<vmem>>, vector<2x7x7xf32>
    %c8 = arith.constant 8 : index
    %198 = memref.load %arg1[%c8] : memref<102xf32, #tpu.memory_space<smem>>
    %199 = vector.broadcast %198 : f32 to vector<2x7x7xf32>
    %200 = arith.mulf %194, %199 : vector<2x7x7xf32>
    %201 = arith.addf %113, %200 : vector<2x7x7xf32>
    %c9 = arith.constant 9 : index
    %202 = memref.load %arg1[%c9] : memref<102xf32, #tpu.memory_space<smem>>
    %203 = vector.broadcast %202 : f32 to vector<2x7x7xf32>
    %204 = arith.mulf %195, %203 : vector<2x7x7xf32>
    %205 = arith.addf %201, %204 : vector<2x7x7xf32>
    %c10 = arith.constant 10 : index
    %206 = memref.load %arg1[%c10] : memref<102xf32, #tpu.memory_space<smem>>
    %207 = vector.broadcast %206 : f32 to vector<2x7x7xf32>
    %208 = arith.mulf %196, %207 : vector<2x7x7xf32>
    %209 = arith.addf %205, %208 : vector<2x7x7xf32>
    %c11 = arith.constant 11 : index
    %210 = memref.load %arg1[%c11] : memref<102xf32, #tpu.memory_space<smem>>
    %211 = vector.broadcast %210 : f32 to vector<2x7x7xf32>
    %212 = arith.mulf %197, %211 : vector<2x7x7xf32>
    %213 = arith.addf %209, %212 : vector<2x7x7xf32>
    %c24 = arith.constant 24 : index
    %214 = memref.load %arg1[%c24] : memref<102xf32, #tpu.memory_space<smem>>
    %215 = vector.broadcast %214 : f32 to vector<2x7x7xf32>
    %216 = arith.mulf %194, %215 : vector<2x7x7xf32>
    %217 = arith.addf %129, %216 : vector<2x7x7xf32>
    %c25 = arith.constant 25 : index
    %218 = memref.load %arg1[%c25] : memref<102xf32, #tpu.memory_space<smem>>
    %219 = vector.broadcast %218 : f32 to vector<2x7x7xf32>
    %220 = arith.mulf %195, %219 : vector<2x7x7xf32>
    %221 = arith.addf %217, %220 : vector<2x7x7xf32>
    %c26 = arith.constant 26 : index
    %222 = memref.load %arg1[%c26] : memref<102xf32, #tpu.memory_space<smem>>
    %223 = vector.broadcast %222 : f32 to vector<2x7x7xf32>
    %224 = arith.mulf %196, %223 : vector<2x7x7xf32>
    %225 = arith.addf %221, %224 : vector<2x7x7xf32>
    %c27 = arith.constant 27 : index
    %226 = memref.load %arg1[%c27] : memref<102xf32, #tpu.memory_space<smem>>
    %227 = vector.broadcast %226 : f32 to vector<2x7x7xf32>
    %228 = arith.mulf %197, %227 : vector<2x7x7xf32>
    %229 = arith.addf %225, %228 : vector<2x7x7xf32>
    %c40 = arith.constant 40 : index
    %230 = memref.load %arg1[%c40] : memref<102xf32, #tpu.memory_space<smem>>
    %231 = vector.broadcast %230 : f32 to vector<2x7x7xf32>
    %232 = arith.mulf %194, %231 : vector<2x7x7xf32>
    %233 = arith.addf %145, %232 : vector<2x7x7xf32>
    %c41 = arith.constant 41 : index
    %234 = memref.load %arg1[%c41] : memref<102xf32, #tpu.memory_space<smem>>
    %235 = vector.broadcast %234 : f32 to vector<2x7x7xf32>
    %236 = arith.mulf %195, %235 : vector<2x7x7xf32>
    %237 = arith.addf %233, %236 : vector<2x7x7xf32>
    %c42 = arith.constant 42 : index
    %238 = memref.load %arg1[%c42] : memref<102xf32, #tpu.memory_space<smem>>
    %239 = vector.broadcast %238 : f32 to vector<2x7x7xf32>
    %240 = arith.mulf %196, %239 : vector<2x7x7xf32>
    %241 = arith.addf %237, %240 : vector<2x7x7xf32>
    %c43 = arith.constant 43 : index
    %242 = memref.load %arg1[%c43] : memref<102xf32, #tpu.memory_space<smem>>
    %243 = vector.broadcast %242 : f32 to vector<2x7x7xf32>
    %244 = arith.mulf %197, %243 : vector<2x7x7xf32>
    %245 = arith.addf %241, %244 : vector<2x7x7xf32>
    %c56 = arith.constant 56 : index
    %246 = memref.load %arg1[%c56] : memref<102xf32, #tpu.memory_space<smem>>
    %247 = vector.broadcast %246 : f32 to vector<2x7x7xf32>
    %248 = arith.mulf %194, %247 : vector<2x7x7xf32>
    %249 = arith.addf %161, %248 : vector<2x7x7xf32>
    %c57 = arith.constant 57 : index
    %250 = memref.load %arg1[%c57] : memref<102xf32, #tpu.memory_space<smem>>
    %251 = vector.broadcast %250 : f32 to vector<2x7x7xf32>
    %252 = arith.mulf %195, %251 : vector<2x7x7xf32>
    %253 = arith.addf %249, %252 : vector<2x7x7xf32>
    %c58 = arith.constant 58 : index
    %254 = memref.load %arg1[%c58] : memref<102xf32, #tpu.memory_space<smem>>
    %255 = vector.broadcast %254 : f32 to vector<2x7x7xf32>
    %256 = arith.mulf %196, %255 : vector<2x7x7xf32>
    %257 = arith.addf %253, %256 : vector<2x7x7xf32>
    %c59 = arith.constant 59 : index
    %258 = memref.load %arg1[%c59] : memref<102xf32, #tpu.memory_space<smem>>
    %259 = vector.broadcast %258 : f32 to vector<2x7x7xf32>
    %260 = arith.mulf %197, %259 : vector<2x7x7xf32>
    %261 = arith.addf %257, %260 : vector<2x7x7xf32>
    %c72 = arith.constant 72 : index
    %262 = memref.load %arg1[%c72] : memref<102xf32, #tpu.memory_space<smem>>
    %263 = vector.broadcast %262 : f32 to vector<2x7x7xf32>
    %264 = arith.mulf %194, %263 : vector<2x7x7xf32>
    %265 = arith.addf %177, %264 : vector<2x7x7xf32>
    %c73 = arith.constant 73 : index
    %266 = memref.load %arg1[%c73] : memref<102xf32, #tpu.memory_space<smem>>
    %267 = vector.broadcast %266 : f32 to vector<2x7x7xf32>
    %268 = arith.mulf %195, %267 : vector<2x7x7xf32>
    %269 = arith.addf %265, %268 : vector<2x7x7xf32>
    %c74 = arith.constant 74 : index
    %270 = memref.load %arg1[%c74] : memref<102xf32, #tpu.memory_space<smem>>
    %271 = vector.broadcast %270 : f32 to vector<2x7x7xf32>
    %272 = arith.mulf %196, %271 : vector<2x7x7xf32>
    %273 = arith.addf %269, %272 : vector<2x7x7xf32>
    %c75 = arith.constant 75 : index
    %274 = memref.load %arg1[%c75] : memref<102xf32, #tpu.memory_space<smem>>
    %275 = vector.broadcast %274 : f32 to vector<2x7x7xf32>
    %276 = arith.mulf %197, %275 : vector<2x7x7xf32>
    %277 = arith.addf %273, %276 : vector<2x7x7xf32>
    %c88 = arith.constant 88 : index
    %278 = memref.load %arg1[%c88] : memref<102xf32, #tpu.memory_space<smem>>
    %279 = vector.broadcast %278 : f32 to vector<2x7x7xf32>
    %280 = arith.mulf %194, %279 : vector<2x7x7xf32>
    %281 = arith.addf %193, %280 : vector<2x7x7xf32>
    %c89 = arith.constant 89 : index
    %282 = memref.load %arg1[%c89] : memref<102xf32, #tpu.memory_space<smem>>
    %283 = vector.broadcast %282 : f32 to vector<2x7x7xf32>
    %284 = arith.mulf %195, %283 : vector<2x7x7xf32>
    %285 = arith.addf %281, %284 : vector<2x7x7xf32>
    %c90 = arith.constant 90 : index
    %286 = memref.load %arg1[%c90] : memref<102xf32, #tpu.memory_space<smem>>
    %287 = vector.broadcast %286 : f32 to vector<2x7x7xf32>
    %288 = arith.mulf %196, %287 : vector<2x7x7xf32>
    %289 = arith.addf %285, %288 : vector<2x7x7xf32>
    %c91 = arith.constant 91 : index
    %290 = memref.load %arg1[%c91] : memref<102xf32, #tpu.memory_space<smem>>
    %291 = vector.broadcast %290 : f32 to vector<2x7x7xf32>
    %292 = arith.mulf %197, %291 : vector<2x7x7xf32>
    %293 = arith.addf %289, %292 : vector<2x7x7xf32>
    %c0_36 = arith.constant 0 : index
    %c3_37 = arith.constant 3 : index
    %c0_38 = arith.constant 0 : index
    %294 = vector.load %arg0[%c0_36, %c3_37, %c0_38] : memref<2x10x10xf32, #tpu.memory_space<vmem>>, vector<2x7x7xf32>
    %c0_39 = arith.constant 0 : index
    %c3_40 = arith.constant 3 : index
    %c1_41 = arith.constant 1 : index
    %295 = vector.load %arg0[%c0_39, %c3_40, %c1_41] : memref<2x10x10xf32, #tpu.memory_space<vmem>>, vector<2x7x7xf32>
    %c0_42 = arith.constant 0 : index
    %c3_43 = arith.constant 3 : index
    %c2_44 = arith.constant 2 : index
    %296 = vector.load %arg0[%c0_42, %c3_43, %c2_44] : memref<2x10x10xf32, #tpu.memory_space<vmem>>, vector<2x7x7xf32>
    %c0_45 = arith.constant 0 : index
    %c3_46 = arith.constant 3 : index
    %c3_47 = arith.constant 3 : index
    %297 = vector.load %arg0[%c0_45, %c3_46, %c3_47] : memref<2x10x10xf32, #tpu.memory_space<vmem>>, vector<2x7x7xf32>
    %c12 = arith.constant 12 : index
    %298 = memref.load %arg1[%c12] : memref<102xf32, #tpu.memory_space<smem>>
    %299 = vector.broadcast %298 : f32 to vector<2x7x7xf32>
    %300 = arith.mulf %294, %299 : vector<2x7x7xf32>
    %301 = arith.addf %213, %300 : vector<2x7x7xf32>
    %c13 = arith.constant 13 : index
    %302 = memref.load %arg1[%c13] : memref<102xf32, #tpu.memory_space<smem>>
    %303 = vector.broadcast %302 : f32 to vector<2x7x7xf32>
    %304 = arith.mulf %295, %303 : vector<2x7x7xf32>
    %305 = arith.addf %301, %304 : vector<2x7x7xf32>
    %c14 = arith.constant 14 : index
    %306 = memref.load %arg1[%c14] : memref<102xf32, #tpu.memory_space<smem>>
    %307 = vector.broadcast %306 : f32 to vector<2x7x7xf32>
    %308 = arith.mulf %296, %307 : vector<2x7x7xf32>
    %309 = arith.addf %305, %308 : vector<2x7x7xf32>
    %c15 = arith.constant 15 : index
    %310 = memref.load %arg1[%c15] : memref<102xf32, #tpu.memory_space<smem>>
    %311 = vector.broadcast %310 : f32 to vector<2x7x7xf32>
    %312 = arith.mulf %297, %311 : vector<2x7x7xf32>
    %313 = arith.addf %309, %312 : vector<2x7x7xf32>
    %c28 = arith.constant 28 : index
    %314 = memref.load %arg1[%c28] : memref<102xf32, #tpu.memory_space<smem>>
    %315 = vector.broadcast %314 : f32 to vector<2x7x7xf32>
    %316 = arith.mulf %294, %315 : vector<2x7x7xf32>
    %317 = arith.addf %229, %316 : vector<2x7x7xf32>
    %c29 = arith.constant 29 : index
    %318 = memref.load %arg1[%c29] : memref<102xf32, #tpu.memory_space<smem>>
    %319 = vector.broadcast %318 : f32 to vector<2x7x7xf32>
    %320 = arith.mulf %295, %319 : vector<2x7x7xf32>
    %321 = arith.addf %317, %320 : vector<2x7x7xf32>
    %c30 = arith.constant 30 : index
    %322 = memref.load %arg1[%c30] : memref<102xf32, #tpu.memory_space<smem>>
    %323 = vector.broadcast %322 : f32 to vector<2x7x7xf32>
    %324 = arith.mulf %296, %323 : vector<2x7x7xf32>
    %325 = arith.addf %321, %324 : vector<2x7x7xf32>
    %c31 = arith.constant 31 : index
    %326 = memref.load %arg1[%c31] : memref<102xf32, #tpu.memory_space<smem>>
    %327 = vector.broadcast %326 : f32 to vector<2x7x7xf32>
    %328 = arith.mulf %297, %327 : vector<2x7x7xf32>
    %329 = arith.addf %325, %328 : vector<2x7x7xf32>
    %c44 = arith.constant 44 : index
    %330 = memref.load %arg1[%c44] : memref<102xf32, #tpu.memory_space<smem>>
    %331 = vector.broadcast %330 : f32 to vector<2x7x7xf32>
    %332 = arith.mulf %294, %331 : vector<2x7x7xf32>
    %333 = arith.addf %245, %332 : vector<2x7x7xf32>
    %c45 = arith.constant 45 : index
    %334 = memref.load %arg1[%c45] : memref<102xf32, #tpu.memory_space<smem>>
    %335 = vector.broadcast %334 : f32 to vector<2x7x7xf32>
    %336 = arith.mulf %295, %335 : vector<2x7x7xf32>
    %337 = arith.addf %333, %336 : vector<2x7x7xf32>
    %c46 = arith.constant 46 : index
    %338 = memref.load %arg1[%c46] : memref<102xf32, #tpu.memory_space<smem>>
    %339 = vector.broadcast %338 : f32 to vector<2x7x7xf32>
    %340 = arith.mulf %296, %339 : vector<2x7x7xf32>
    %341 = arith.addf %337, %340 : vector<2x7x7xf32>
    %c47 = arith.constant 47 : index
    %342 = memref.load %arg1[%c47] : memref<102xf32, #tpu.memory_space<smem>>
    %343 = vector.broadcast %342 : f32 to vector<2x7x7xf32>
    %344 = arith.mulf %297, %343 : vector<2x7x7xf32>
    %345 = arith.addf %341, %344 : vector<2x7x7xf32>
    %c60 = arith.constant 60 : index
    %346 = memref.load %arg1[%c60] : memref<102xf32, #tpu.memory_space<smem>>
    %347 = vector.broadcast %346 : f32 to vector<2x7x7xf32>
    %348 = arith.mulf %294, %347 : vector<2x7x7xf32>
    %349 = arith.addf %261, %348 : vector<2x7x7xf32>
    %c61 = arith.constant 61 : index
    %350 = memref.load %arg1[%c61] : memref<102xf32, #tpu.memory_space<smem>>
    %351 = vector.broadcast %350 : f32 to vector<2x7x7xf32>
    %352 = arith.mulf %295, %351 : vector<2x7x7xf32>
    %353 = arith.addf %349, %352 : vector<2x7x7xf32>
    %c62 = arith.constant 62 : index
    %354 = memref.load %arg1[%c62] : memref<102xf32, #tpu.memory_space<smem>>
    %355 = vector.broadcast %354 : f32 to vector<2x7x7xf32>
    %356 = arith.mulf %296, %355 : vector<2x7x7xf32>
    %357 = arith.addf %353, %356 : vector<2x7x7xf32>
    %c63 = arith.constant 63 : index
    %358 = memref.load %arg1[%c63] : memref<102xf32, #tpu.memory_space<smem>>
    %359 = vector.broadcast %358 : f32 to vector<2x7x7xf32>
    %360 = arith.mulf %297, %359 : vector<2x7x7xf32>
    %361 = arith.addf %357, %360 : vector<2x7x7xf32>
    %c76 = arith.constant 76 : index
    %362 = memref.load %arg1[%c76] : memref<102xf32, #tpu.memory_space<smem>>
    %363 = vector.broadcast %362 : f32 to vector<2x7x7xf32>
    %364 = arith.mulf %294, %363 : vector<2x7x7xf32>
    %365 = arith.addf %277, %364 : vector<2x7x7xf32>
    %c77 = arith.constant 77 : index
    %366 = memref.load %arg1[%c77] : memref<102xf32, #tpu.memory_space<smem>>
    %367 = vector.broadcast %366 : f32 to vector<2x7x7xf32>
    %368 = arith.mulf %295, %367 : vector<2x7x7xf32>
    %369 = arith.addf %365, %368 : vector<2x7x7xf32>
    %c78 = arith.constant 78 : index
    %370 = memref.load %arg1[%c78] : memref<102xf32, #tpu.memory_space<smem>>
    %371 = vector.broadcast %370 : f32 to vector<2x7x7xf32>
    %372 = arith.mulf %296, %371 : vector<2x7x7xf32>
    %373 = arith.addf %369, %372 : vector<2x7x7xf32>
    %c79 = arith.constant 79 : index
    %374 = memref.load %arg1[%c79] : memref<102xf32, #tpu.memory_space<smem>>
    %375 = vector.broadcast %374 : f32 to vector<2x7x7xf32>
    %376 = arith.mulf %297, %375 : vector<2x7x7xf32>
    %377 = arith.addf %373, %376 : vector<2x7x7xf32>
    %c92 = arith.constant 92 : index
    %378 = memref.load %arg1[%c92] : memref<102xf32, #tpu.memory_space<smem>>
    %379 = vector.broadcast %378 : f32 to vector<2x7x7xf32>
    %380 = arith.mulf %294, %379 : vector<2x7x7xf32>
    %381 = arith.addf %293, %380 : vector<2x7x7xf32>
    %c93 = arith.constant 93 : index
    %382 = memref.load %arg1[%c93] : memref<102xf32, #tpu.memory_space<smem>>
    %383 = vector.broadcast %382 : f32 to vector<2x7x7xf32>
    %384 = arith.mulf %295, %383 : vector<2x7x7xf32>
    %385 = arith.addf %381, %384 : vector<2x7x7xf32>
    %c94 = arith.constant 94 : index
    %386 = memref.load %arg1[%c94] : memref<102xf32, #tpu.memory_space<smem>>
    %387 = vector.broadcast %386 : f32 to vector<2x7x7xf32>
    %388 = arith.mulf %296, %387 : vector<2x7x7xf32>
    %389 = arith.addf %385, %388 : vector<2x7x7xf32>
    %c95 = arith.constant 95 : index
    %390 = memref.load %arg1[%c95] : memref<102xf32, #tpu.memory_space<smem>>
    %391 = vector.broadcast %390 : f32 to vector<2x7x7xf32>
    %392 = arith.mulf %297, %391 : vector<2x7x7xf32>
    %393 = arith.addf %389, %392 : vector<2x7x7xf32>
    %c96 = arith.constant 96 : index
    %394 = memref.load %arg1[%c96] : memref<102xf32, #tpu.memory_space<smem>>
    %395 = vector.broadcast %394 : f32 to vector<2x7x7xf32>
    %396 = arith.addf %313, %395 : vector<2x7x7xf32>
    %cst = arith.constant 0.000000e+00 : f32
    %397 = vector.broadcast %cst : f32 to vector<2x7x7xf32>
    %398 = arith.maximumf %396, %397 : vector<2x7x7xf32>
    %399 = vector.extract_strided_slice %398 {offsets = [0, 0, 0], sizes = [2, 6, 7], strides = [1, 1, 1]} : vector<2x7x7xf32> to vector<2x6x7xf32>
    %400 = vector.extract_strided_slice %398 {offsets = [0, 1, 0], sizes = [2, 6, 7], strides = [1, 1, 1]} : vector<2x7x7xf32> to vector<2x6x7xf32>
    %401 = arith.maximumf %399, %400 : vector<2x6x7xf32>
    %402 = vector.extract_strided_slice %401 {offsets = [0, 0, 0], sizes = [2, 6, 6], strides = [1, 1, 1]} : vector<2x6x7xf32> to vector<2x6x6xf32>
    %403 = vector.extract_strided_slice %401 {offsets = [0, 0, 1], sizes = [2, 6, 6], strides = [1, 1, 1]} : vector<2x6x7xf32> to vector<2x6x6xf32>
    %404 = arith.maximumf %402, %403 : vector<2x6x6xf32>
    %405 = vector.extract_strided_slice %404 {offsets = [0, 0, 0], sizes = [2, 1, 6], strides = [1, 1, 1]} : vector<2x6x6xf32> to vector<2x1x6xf32>
    %406 = vector.shape_cast %405 : vector<2x1x6xf32> to vector<2x6xf32>
    %407 = vector.extract_strided_slice %404 {offsets = [0, 2, 0], sizes = [2, 1, 6], strides = [1, 1, 1]} : vector<2x6x6xf32> to vector<2x1x6xf32>
    %408 = vector.shape_cast %407 : vector<2x1x6xf32> to vector<2x6xf32>
    %409 = vector.extract_strided_slice %404 {offsets = [0, 4, 0], sizes = [2, 1, 6], strides = [1, 1, 1]} : vector<2x6x6xf32> to vector<2x1x6xf32>
    %410 = vector.shape_cast %409 : vector<2x1x6xf32> to vector<2x6xf32>
    %c97 = arith.constant 97 : index
    %411 = memref.load %arg1[%c97] : memref<102xf32, #tpu.memory_space<smem>>
    %412 = vector.broadcast %411 : f32 to vector<2x7x7xf32>
    %413 = arith.addf %329, %412 : vector<2x7x7xf32>
    %cst_48 = arith.constant 0.000000e+00 : f32
    %414 = vector.broadcast %cst_48 : f32 to vector<2x7x7xf32>
    %415 = arith.maximumf %413, %414 : vector<2x7x7xf32>
    %416 = vector.extract_strided_slice %415 {offsets = [0, 0, 0], sizes = [2, 6, 7], strides = [1, 1, 1]} : vector<2x7x7xf32> to vector<2x6x7xf32>
    %417 = vector.extract_strided_slice %415 {offsets = [0, 1, 0], sizes = [2, 6, 7], strides = [1, 1, 1]} : vector<2x7x7xf32> to vector<2x6x7xf32>
    %418 = arith.maximumf %416, %417 : vector<2x6x7xf32>
    %419 = vector.extract_strided_slice %418 {offsets = [0, 0, 0], sizes = [2, 6, 6], strides = [1, 1, 1]} : vector<2x6x7xf32> to vector<2x6x6xf32>
    %420 = vector.extract_strided_slice %418 {offsets = [0, 0, 1], sizes = [2, 6, 6], strides = [1, 1, 1]} : vector<2x6x7xf32> to vector<2x6x6xf32>
    %421 = arith.maximumf %419, %420 : vector<2x6x6xf32>
    %422 = vector.extract_strided_slice %421 {offsets = [0, 0, 0], sizes = [2, 1, 6], strides = [1, 1, 1]} : vector<2x6x6xf32> to vector<2x1x6xf32>
    %423 = vector.shape_cast %422 : vector<2x1x6xf32> to vector<2x6xf32>
    %424 = vector.extract_strided_slice %421 {offsets = [0, 2, 0], sizes = [2, 1, 6], strides = [1, 1, 1]} : vector<2x6x6xf32> to vector<2x1x6xf32>
    %425 = vector.shape_cast %424 : vector<2x1x6xf32> to vector<2x6xf32>
    %426 = vector.extract_strided_slice %421 {offsets = [0, 4, 0], sizes = [2, 1, 6], strides = [1, 1, 1]} : vector<2x6x6xf32> to vector<2x1x6xf32>
    %427 = vector.shape_cast %426 : vector<2x1x6xf32> to vector<2x6xf32>
    %c98 = arith.constant 98 : index
    %428 = memref.load %arg1[%c98] : memref<102xf32, #tpu.memory_space<smem>>
    %429 = vector.broadcast %428 : f32 to vector<2x7x7xf32>
    %430 = arith.addf %345, %429 : vector<2x7x7xf32>
    %cst_49 = arith.constant 0.000000e+00 : f32
    %431 = vector.broadcast %cst_49 : f32 to vector<2x7x7xf32>
    %432 = arith.maximumf %430, %431 : vector<2x7x7xf32>
    %433 = vector.extract_strided_slice %432 {offsets = [0, 0, 0], sizes = [2, 6, 7], strides = [1, 1, 1]} : vector<2x7x7xf32> to vector<2x6x7xf32>
    %434 = vector.extract_strided_slice %432 {offsets = [0, 1, 0], sizes = [2, 6, 7], strides = [1, 1, 1]} : vector<2x7x7xf32> to vector<2x6x7xf32>
    %435 = arith.maximumf %433, %434 : vector<2x6x7xf32>
    %436 = vector.extract_strided_slice %435 {offsets = [0, 0, 0], sizes = [2, 6, 6], strides = [1, 1, 1]} : vector<2x6x7xf32> to vector<2x6x6xf32>
    %437 = vector.extract_strided_slice %435 {offsets = [0, 0, 1], sizes = [2, 6, 6], strides = [1, 1, 1]} : vector<2x6x7xf32> to vector<2x6x6xf32>
    %438 = arith.maximumf %436, %437 : vector<2x6x6xf32>
    %439 = vector.extract_strided_slice %438 {offsets = [0, 0, 0], sizes = [2, 1, 6], strides = [1, 1, 1]} : vector<2x6x6xf32> to vector<2x1x6xf32>
    %440 = vector.shape_cast %439 : vector<2x1x6xf32> to vector<2x6xf32>
    %441 = vector.extract_strided_slice %438 {offsets = [0, 2, 0], sizes = [2, 1, 6], strides = [1, 1, 1]} : vector<2x6x6xf32> to vector<2x1x6xf32>
    %442 = vector.shape_cast %441 : vector<2x1x6xf32> to vector<2x6xf32>
    %443 = vector.extract_strided_slice %438 {offsets = [0, 4, 0], sizes = [2, 1, 6], strides = [1, 1, 1]} : vector<2x6x6xf32> to vector<2x1x6xf32>
    %444 = vector.shape_cast %443 : vector<2x1x6xf32> to vector<2x6xf32>
    %c99 = arith.constant 99 : index
    %445 = memref.load %arg1[%c99] : memref<102xf32, #tpu.memory_space<smem>>
    %446 = vector.broadcast %445 : f32 to vector<2x7x7xf32>
    %447 = arith.addf %361, %446 : vector<2x7x7xf32>
    %cst_50 = arith.constant 0.000000e+00 : f32
    %448 = vector.broadcast %cst_50 : f32 to vector<2x7x7xf32>
    %449 = arith.maximumf %447, %448 : vector<2x7x7xf32>
    %450 = vector.extract_strided_slice %449 {offsets = [0, 0, 0], sizes = [2, 6, 7], strides = [1, 1, 1]} : vector<2x7x7xf32> to vector<2x6x7xf32>
    %451 = vector.extract_strided_slice %449 {offsets = [0, 1, 0], sizes = [2, 6, 7], strides = [1, 1, 1]} : vector<2x7x7xf32> to vector<2x6x7xf32>
    %452 = arith.maximumf %450, %451 : vector<2x6x7xf32>
    %453 = vector.extract_strided_slice %452 {offsets = [0, 0, 0], sizes = [2, 6, 6], strides = [1, 1, 1]} : vector<2x6x7xf32> to vector<2x6x6xf32>
    %454 = vector.extract_strided_slice %452 {offsets = [0, 0, 1], sizes = [2, 6, 6], strides = [1, 1, 1]} : vector<2x6x7xf32> to vector<2x6x6xf32>
    %455 = arith.maximumf %453, %454 : vector<2x6x6xf32>
    %456 = vector.extract_strided_slice %455 {offsets = [0, 0, 0], sizes = [2, 1, 6], strides = [1, 1, 1]} : vector<2x6x6xf32> to vector<2x1x6xf32>
    %457 = vector.shape_cast %456 : vector<2x1x6xf32> to vector<2x6xf32>
    %458 = vector.extract_strided_slice %455 {offsets = [0, 2, 0], sizes = [2, 1, 6], strides = [1, 1, 1]} : vector<2x6x6xf32> to vector<2x1x6xf32>
    %459 = vector.shape_cast %458 : vector<2x1x6xf32> to vector<2x6xf32>
    %460 = vector.extract_strided_slice %455 {offsets = [0, 4, 0], sizes = [2, 1, 6], strides = [1, 1, 1]} : vector<2x6x6xf32> to vector<2x1x6xf32>
    %461 = vector.shape_cast %460 : vector<2x1x6xf32> to vector<2x6xf32>
    %c100 = arith.constant 100 : index
    %462 = memref.load %arg1[%c100] : memref<102xf32, #tpu.memory_space<smem>>
    %463 = vector.broadcast %462 : f32 to vector<2x7x7xf32>
    %464 = arith.addf %377, %463 : vector<2x7x7xf32>
    %cst_51 = arith.constant 0.000000e+00 : f32
    %465 = vector.broadcast %cst_51 : f32 to vector<2x7x7xf32>
    %466 = arith.maximumf %464, %465 : vector<2x7x7xf32>
    %467 = vector.extract_strided_slice %466 {offsets = [0, 0, 0], sizes = [2, 6, 7], strides = [1, 1, 1]} : vector<2x7x7xf32> to vector<2x6x7xf32>
    %468 = vector.extract_strided_slice %466 {offsets = [0, 1, 0], sizes = [2, 6, 7], strides = [1, 1, 1]} : vector<2x7x7xf32> to vector<2x6x7xf32>
    %469 = arith.maximumf %467, %468 : vector<2x6x7xf32>
    %470 = vector.extract_strided_slice %469 {offsets = [0, 0, 0], sizes = [2, 6, 6], strides = [1, 1, 1]} : vector<2x6x7xf32> to vector<2x6x6xf32>
    %471 = vector.extract_strided_slice %469 {offsets = [0, 0, 1], sizes = [2, 6, 6], strides = [1, 1, 1]} : vector<2x6x7xf32> to vector<2x6x6xf32>
    %472 = arith.maximumf %470, %471 : vector<2x6x6xf32>
    %473 = vector.extract_strided_slice %472 {offsets = [0, 0, 0], sizes = [2, 1, 6], strides = [1, 1, 1]} : vector<2x6x6xf32> to vector<2x1x6xf32>
    %474 = vector.shape_cast %473 : vector<2x1x6xf32> to vector<2x6xf32>
    %475 = vector.extract_strided_slice %472 {offsets = [0, 2, 0], sizes = [2, 1, 6], strides = [1, 1, 1]} : vector<2x6x6xf32> to vector<2x1x6xf32>
    %476 = vector.shape_cast %475 : vector<2x1x6xf32> to vector<2x6xf32>
    %477 = vector.extract_strided_slice %472 {offsets = [0, 4, 0], sizes = [2, 1, 6], strides = [1, 1, 1]} : vector<2x6x6xf32> to vector<2x1x6xf32>
    %478 = vector.shape_cast %477 : vector<2x1x6xf32> to vector<2x6xf32>
    %c101 = arith.constant 101 : index
    %479 = memref.load %arg1[%c101] : memref<102xf32, #tpu.memory_space<smem>>
    %480 = vector.broadcast %479 : f32 to vector<2x7x7xf32>
    %481 = arith.addf %393, %480 : vector<2x7x7xf32>
    %cst_52 = arith.constant 0.000000e+00 : f32
    %482 = vector.broadcast %cst_52 : f32 to vector<2x7x7xf32>
    %483 = arith.maximumf %481, %482 : vector<2x7x7xf32>
    %484 = vector.extract_strided_slice %483 {offsets = [0, 0, 0], sizes = [2, 6, 7], strides = [1, 1, 1]} : vector<2x7x7xf32> to vector<2x6x7xf32>
    %485 = vector.extract_strided_slice %483 {offsets = [0, 1, 0], sizes = [2, 6, 7], strides = [1, 1, 1]} : vector<2x7x7xf32> to vector<2x6x7xf32>
    %486 = arith.maximumf %484, %485 : vector<2x6x7xf32>
    %487 = vector.extract_strided_slice %486 {offsets = [0, 0, 0], sizes = [2, 6, 6], strides = [1, 1, 1]} : vector<2x6x7xf32> to vector<2x6x6xf32>
    %488 = vector.extract_strided_slice %486 {offsets = [0, 0, 1], sizes = [2, 6, 6], strides = [1, 1, 1]} : vector<2x6x7xf32> to vector<2x6x6xf32>
    %489 = arith.maximumf %487, %488 : vector<2x6x6xf32>
    %490 = vector.extract_strided_slice %489 {offsets = [0, 0, 0], sizes = [2, 1, 6], strides = [1, 1, 1]} : vector<2x6x6xf32> to vector<2x1x6xf32>
    %491 = vector.shape_cast %490 : vector<2x1x6xf32> to vector<2x6xf32>
    %492 = vector.extract_strided_slice %489 {offsets = [0, 2, 0], sizes = [2, 1, 6], strides = [1, 1, 1]} : vector<2x6x6xf32> to vector<2x1x6xf32>
    %493 = vector.shape_cast %492 : vector<2x1x6xf32> to vector<2x6xf32>
    %494 = vector.extract_strided_slice %489 {offsets = [0, 4, 0], sizes = [2, 1, 6], strides = [1, 1, 1]} : vector<2x6x6xf32> to vector<2x1x6xf32>
    %495 = vector.shape_cast %494 : vector<2x1x6xf32> to vector<2x6xf32>
    %496 = tpu.concatenate %406, %408, %410, %423, %425, %427, %440, %442, %444, %457, %459, %461, %474, %476, %478, %491 in 1 : vector<2x6xf32>, vector<2x6xf32>, vector<2x6xf32>, vector<2x6xf32>, vector<2x6xf32>, vector<2x6xf32>, vector<2x6xf32>, vector<2x6xf32>, vector<2x6xf32>, vector<2x6xf32>, vector<2x6xf32>, vector<2x6xf32>, vector<2x6xf32>, vector<2x6xf32>, vector<2x6xf32>, vector<2x6xf32> -> vector<2x96xf32>
    %497 = tpu.concatenate %493, %495 in 1 : vector<2x6xf32>, vector<2x6xf32> -> vector<2x12xf32>
    %498 = tpu.concatenate %496, %497 in 1 : vector<2x96xf32>, vector<2x12xf32> -> vector<2x108xf32>
    %c0_53 = arith.constant 0 : index
    %c0_54 = arith.constant 0 : index
    %499 = vector.load %arg2[%c0_53, %c0_54] : memref<128x12xf32, #tpu.memory_space<vmem>>, vector<108x12xf32>
    %cst_55 = arith.constant dense<0.000000e+00> : vector<2x12xf32>
    %500 = tpu.matmul %498, %499, %cst_55 {dimension_numbers = #tpu.dot_dimension_numbers<[1], [0], [0], [1], [0, 0, 1, 1], [], []>} : vector<2x108xf32>, vector<108x12xf32>, vector<2x12xf32> -> vector<2x12xf32>
    %c108 = arith.constant 108 : index
    %c0_56 = arith.constant 0 : index
    %501 = vector.load %arg2[%c108, %c0_56] : memref<128x12xf32, #tpu.memory_space<vmem>>, vector<1x12xf32>
    %502 = vector.broadcast %501 : vector<1x12xf32> to vector<2x12xf32>
    %503 = arith.addf %500, %502 : vector<2x12xf32>
    %cst_57 = arith.constant 0.000000e+00 : f32
    %504 = vector.broadcast %cst_57 : f32 to vector<2x12xf32>
    %505 = arith.maximumf %503, %504 : vector<2x12xf32>
    %c112 = arith.constant 112 : index
    %c0_58 = arith.constant 0 : index
    %506 = vector.load %arg2[%c112, %c0_58] : memref<128x12xf32, #tpu.memory_space<vmem>>, vector<12x10xf32>
    %cst_59 = arith.constant dense<0.000000e+00> : vector<2x10xf32>
    %507 = tpu.matmul %505, %506, %cst_59 {dimension_numbers = #tpu.dot_dimension_numbers<[1], [0], [0], [1], [0, 0, 1, 1], [], []>} : vector<2x12xf32>, vector<12x10xf32>, vector<2x10xf32> -> vector<2x10xf32>
    %c124 = arith.constant 124 : index
    %c0_60 = arith.constant 0 : index
    %508 = vector.load %arg2[%c124, %c0_60] : memref<128x12xf32, #tpu.memory_space<vmem>>, vector<1x10xf32>
    %509 = vector.broadcast %508 : vector<1x10xf32> to vector<2x10xf32>
    %510 = arith.addf %507, %509 : vector<2x10xf32>
    %cst_61 = arith.constant dense<0xFF800000> : vector<2xf32>
    %511 = vector.multi_reduction <maximumf>, %510, %cst_61 [1] : vector<2x10xf32> to vector<2xf32>
    %512 = vector.shape_cast %511 : vector<2xf32> to vector<2x1xf32>
    %513 = vector.broadcast %512 : vector<2x1xf32> to vector<2x10xf32>
    %514 = arith.subf %510, %513 : vector<2x10xf32>
    %515 = math.exp %514 : vector<2x10xf32>
    %cst_62 = arith.constant dense<0.000000e+00> : vector<2xf32>
    %516 = vector.multi_reduction <add>, %515, %cst_62 [1] : vector<2x10xf32> to vector<2xf32>
    %517 = vector.shape_cast %516 : vector<2xf32> to vector<2x1xf32>
    %518 = tpu.reciprocal %517 {approx = true} : vector<2x1xf32> -> vector<2x1xf32>
    %519 = vector.broadcast %518 : vector<2x1xf32> to vector<2x10xf32>
    %520 = arith.mulf %515, %519 : vector<2x10xf32>
    %c0_63 = arith.constant 0 : index
    %c0_64 = arith.constant 0 : index
    %521 = vector.load %arg3[%c0_63, %c0_64] : memref<2x10xf32, #tpu.memory_space<vmem>>, vector<2x10xf32>
    tpu.vector_store %arg3[%c0_63, %c0_64], %520 {strides = array<i32>} : memref<2x10xf32, #tpu.memory_space<vmem>>, vector<2x10xf32>,
    return
  }
}

</mosaic_0001>

<llo_original>
// kernel: tpu_custom_call.1
$region0: #{tpu_custom_call.1}
  #allocation0 [shape = 'u32[]', space=smem, size = 0x4, offset = 0x4, fixed_abs, tag = 'smem constant byte address 0x4 - core index']
  #allocation1 [shape = 'u32[144,128]{1,0:T(1,128)}', space=vmem, size = 0x12000, scoped, tag = 'internal scratch']
  %s0 = inlined_call_operand.vmem [shape: f32[2,10,10], index: 0, kind: input, shape index: {}]
  %s1 = inlined_call_operand.vmem [shape: f32[102], index: 1, kind: input, shape index: {}]
  %s2 = inlined_call_operand.vmem [shape: f32[128,12], index: 2, kind: input, shape index: {}]
  %s3 = inlined_call_operand.hbm [shape: f32[2,10], index: 3, kind: output, shape index: {}]
  %s4 = sld [smem:[#allocation0]]
  $region26: #{tpu_custom_call.1} parent=0
    _
  %s6 = ssub.s32 1, %s4
  %s7 = scalar_select 0, %s6, %s4
  $region1: #{tpu_custom_call.1} parent=0
    #allocation2 [shape = 'u8[512]{0}', space=smem, size = 0x200, scoped, tag = 'input window, operand 1, single buffered']
    #allocation3 [shape = 's32[1]{0}', space=sflag, size = 0x4, scoped, tag = 'scoped memory for tpu_custom_call.1']
    #allocation4 [shape = 's32[1]{0}', space=sflag, size = 0x4, scoped, tag = 'scoped memory for tpu_custom_call.1']
    #allocation5 [shape = 'u8[1024]{0}', space=vmem, size = 0x400, scoped, tag = 'output window, operand 0, single buffered']
    %8 = vsyncpa [#allocation4], 0
    %9 = vsyncpa [#allocation3], 0
    // Predicated region
    $region2: #{tpu_custom_call.1} parent=1 // pred_check
      _
    $region3: #{tpu_custom_call.1} parent=1 // pred_check_branch
      %11 = sbr.rel (0) target = $region5
    $region4: #{tpu_custom_call.1} parent=1 // pred_region
      _
    $region5: #{tpu_custom_call.1} parent=1 // pred_fallthru
      _
    // Predicated region
    $region6: #{tpu_custom_call.1} parent=1 // pred_check
      _
    $region7: #{tpu_custom_call.1} parent=1 // pred_check_branch
      %13 = sbr.rel (0) target = $region9
    $region8: #{tpu_custom_call.1} parent=1 // pred_region
      %s15 = ssub.s32 16, 16
      %16 = vsyncadd [#allocation4], %s15
      %s18 = sshll.u32 %s1, 4
      %s19 = int_to_ptr.vmem [resolvable:$true] %s18
      %21 = dma.vmem_to_smem %s19, 16, [#allocation2], [#allocation4]
    $region9: #{tpu_custom_call.1} parent=1 // pred_fallthru
      _
    // Predicated region
    $region10: #{tpu_custom_call.1} parent=1 // pred_check
      _
    $region11: #{tpu_custom_call.1} parent=1 // pred_check_branch
      %23 = sbr.rel (0) target = $region13
    $region12: #{tpu_custom_call.1} parent=1 // pred_region
      _
    $region13: #{tpu_custom_call.1} parent=1 // pred_fallthru
      _
    // Predicated region
    $region14: #{tpu_custom_call.1} parent=1 // pred_check
      _
    $region15: #{tpu_custom_call.1} parent=1 // pred_check_branch
      %25 = sbr.rel (0) target = $region17
    $region16: #{tpu_custom_call.1} parent=1 // pred_region
      %26 = dma.done [#allocation4], 16
    $region17: #{tpu_custom_call.1} parent=1 // pred_fallthru
      _
    %27 = sfence
    %v28 = vld [vmem:[%s0] sm:$0x7f]
    %v29 = vld [vmem:[%s0 + $0x10] sm:$0x7f]
    %s30 = sld [smem:[#allocation2]]
    %v31 = vstv %s30
    %v32 = vmul.f32 %v28, %v31
    %v33 = vmul.f32 %v29, %v31
    %s34 = sld [smem:[#allocation2 + $0x1]]
    %v35 = vstv %s34
    %v36 = vmul.f32 %v28, %v35
    %v37 = vmul.f32 %v29, %v35
    %40 = vrot.lane.b32.xlu0 %v36, 127
    %v41 = vpop.permute.xlu0 %40
    %42 = vrot.lane.b32.xlu0 %v37, 127
    %v43 = vpop.permute.xlu0 %42
    %v46 = vadd.f32 %v32, %v41
    %v47 = vadd.f32 %v33, %v43
    %s48 = sld [smem:[#allocation2 + $0x2]]
    %v49 = vstv %s48
    %v50 = vmul.f32 %v28, %v49
    %v51 = vmul.f32 %v29, %v49
    %54 = vrot.lane.b32.xlu0 %v50, 126
    %v55 = vpop.permute.xlu0 %54
    %56 = vrot.lane.b32.xlu0 %v51, 126
    %v57 = vpop.permute.xlu0 %56
    %v60 = vadd.f32 %v46, %v55
    %v61 = vadd.f32 %v47, %v57
    %s62 = sld [smem:[#allocation2 + $0x3]]
    %v63 = vstv %s62
    %v64 = vmul.f32 %v28, %v63
    %v65 = vmul.f32 %v29, %v63
    %68 = vrot.lane.b32.xlu0 %v64, 125
    %v69 = vpop.permute.xlu0 %68
    %70 = vrot.lane.b32.xlu0 %v65, 125
    %v71 = vpop.permute.xlu0 %70
    %v74 = vadd.f32 %v60, %v69
    %v75 = vadd.f32 %v61, %v71
    %s76 = sld [smem:[#allocation2 + $0x10]]
    %v77 = vstv %s76
    %v78 = vmul.f32 %v28, %v77
    %v79 = vmul.f32 %v29, %v77
    %s80 = sld [smem:[#allocation2 + $0x11]]
    %v81 = vstv %s80
    %v82 = vmul.f32 %v28, %v81
    %v83 = vmul.f32 %v29, %v81
    %86 = vrot.lane.b32.xlu0 %v82, 127
    %v87 = vpop.permute.xlu0 %86
    %88 = vrot.lane.b32.xlu0 %v83, 127
    %v89 = vpop.permute.xlu0 %88
    %v92 = vadd.f32 %v78, %v87
    %v93 = vadd.f32 %v79, %v89
    %s94 = sld [smem:[#allocation2 + $0x12]]
    %v95 = vstv %s94
    %v96 = vmul.f32 %v28, %v95
    %v97 = vmul.f32 %v29, %v95
    %100 = vrot.lane.b32.xlu0 %v96, 126
    %v101 = vpop.permute.xlu0 %100
    %102 = vrot.lane.b32.xlu0 %v97, 126
    %v103 = vpop.permute.xlu0 %102
    %v106 = vadd.f32 %v92, %v101
    %v107 = vadd.f32 %v93, %v103
    %s108 = sld [smem:[#allocation2 + $0x13]]
    %v109 = vstv %s108
    %v110 = vmul.f32 %v28, %v109
    %v111 = vmul.f32 %v29, %v109
    %114 = vrot.lane.b32.xlu0 %v110, 125
    %v115 = vpop.permute.xlu0 %114
    %116 = vrot.lane.b32.xlu0 %v111, 125
    %v117 = vpop.permute.xlu0 %116
    %v120 = vadd.f32 %v106, %v115
    %v121 = vadd.f32 %v107, %v117
    %s122 = sld [smem:[#allocation2 + $0x20]]
    %v123 = vstv %s122
    %v124 = vmul.f32 %v28, %v123
    %v125 = vmul.f32 %v29, %v123
    %s126 = sld [smem:[#allocation2 + $0x21]]
    %v127 = vstv %s126
    %v128 = vmul.f32 %v28, %v127
    %v129 = vmul.f32 %v29, %v127
    %132 = vrot.lane.b32.xlu0 %v128, 127
    %v133 = vpop.permute.xlu0 %132
    %134 = vrot.lane.b32.xlu0 %v129, 127
    %v135 = vpop.permute.xlu0 %134
    %v138 = vadd.f32 %v124, %v133
    %v139 = vadd.f32 %v125, %v135
    %s140 = sld [smem:[#allocation2 + $0x22]]
    %v141 = vstv %s140
    %v142 = vmul.f32 %v28, %v141
    %v143 = vmul.f32 %v29, %v141
    %146 = vrot.lane.b32.xlu0 %v142, 126
    %v147 = vpop.permute.xlu0 %146
    %148 = vrot.lane.b32.xlu0 %v143, 126
    %v149 = vpop.permute.xlu0 %148
    %v152 = vadd.f32 %v138, %v147
    %v153 = vadd.f32 %v139, %v149
    %s154 = sld [smem:[#allocation2 + $0x23]]
    %v155 = vstv %s154
    %v156 = vmul.f32 %v28, %v155
    %v157 = vmul.f32 %v29, %v155
    %160 = vrot.lane.b32.xlu0 %v156, 125
    %v161 = vpop.permute.xlu0 %160
    %162 = vrot.lane.b32.xlu0 %v157, 125
    %v163 = vpop.permute.xlu0 %162
    %v166 = vadd.f32 %v152, %v161
    %v167 = vadd.f32 %v153, %v163
    %s168 = sld [smem:[#allocation2 + $0x30]]
    %v169 = vstv %s168
    %v170 = vmul.f32 %v28, %v169
    %v171 = vmul.f32 %v29, %v169
    %s172 = sld [smem:[#allocation2 + $0x31]]
    %v173 = vstv %s172
    %v174 = vmul.f32 %v28, %v173
    %v175 = vmul.f32 %v29, %v173
    %178 = vrot.lane.b32.xlu0 %v174, 127
    %v179 = vpop.permute.xlu0 %178
    %180 = vrot.lane.b32.xlu0 %v175, 127
    %v181 = vpop.permute.xlu0 %180
    %v184 = vadd.f32 %v170, %v179
    %v185 = vadd.f32 %v171, %v181
    %s186 = sld [smem:[#allocation2 + $0x32]]
    %v187 = vstv %s186
    %v188 = vmul.f32 %v28, %v187
    %v189 = vmul.f32 %v29, %v187
    %192 = vrot.lane.b32.xlu0 %v188, 126
    %v193 = vpop.permute.xlu0 %192
    %194 = vrot.lane.b32.xlu0 %v189, 126
    %v195 = vpop.permute.xlu0 %194
    %v198 = vadd.f32 %v184, %v193
    %v199 = vadd.f32 %v185, %v195
    %s200 = sld [smem:[#allocation2 + $0x33]]
    %v201 = vstv %s200
    %v202 = vmul.f32 %v28, %v201
    %v203 = vmul.f32 %v29, %v201
    %206 = vrot.lane.b32.xlu0 %v202, 125
    %v207 = vpop.permute.xlu0 %206
    %208 = vrot.lane.b32.xlu0 %v203, 125
    %v209 = vpop.permute.xlu0 %208
    %v212 = vadd.f32 %v198, %v207
    %v213 = vadd.f32 %v199, %v209
    %s214 = sld [smem:[#allocation2 + $0x40]]
    %v215 = vstv %s214
    %v216 = vmul.f32 %v28, %v215
    %v217 = vmul.f32 %v29, %v215
    %s218 = sld [smem:[#allocation2 + $0x41]]
    %v219 = vstv %s218
    %v220 = vmul.f32 %v28, %v219
    %v221 = vmul.f32 %v29, %v219
    %224 = vrot.lane.b32.xlu0 %v220, 127
    %v225 = vpop.permute.xlu0 %224
    %226 = vrot.lane.b32.xlu0 %v221, 127
    %v227 = vpop.permute.xlu0 %226
    %v230 = vadd.f32 %v216, %v225
    %v231 = vadd.f32 %v217, %v227
    %s232 = sld [smem:[#allocation2 + $0x42]]
    %v233 = vstv %s232
    %v234 = vmul.f32 %v28, %v233
    %v235 = vmul.f32 %v29, %v233
    %238 = vrot.lane.b32.xlu0 %v234, 126
    %v239 = vpop.permute.xlu0 %238
    %240 = vrot.lane.b32.xlu0 %v235, 126
    %v241 = vpop.permute.xlu0 %240
    %v244 = vadd.f32 %v230, %v239
    %v245 = vadd.f32 %v231, %v241
    %s246 = sld [smem:[#allocation2 + $0x43]]
    %v247 = vstv %s246
    %v248 = vmul.f32 %v28, %v247
    %v249 = vmul.f32 %v29, %v247
    %252 = vrot.lane.b32.xlu0 %v248, 125
    %v253 = vpop.permute.xlu0 %252
    %254 = vrot.lane.b32.xlu0 %v249, 125
    %v255 = vpop.permute.xlu0 %254
    %v258 = vadd.f32 %v244, %v253
    %v259 = vadd.f32 %v245, %v255
    %s260 = sld [smem:[#allocation2 + $0x50]]
    %v261 = vstv %s260
    %v262 = vmul.f32 %v28, %v261
    %v263 = vmul.f32 %v29, %v261
    %s264 = sld [smem:[#allocation2 + $0x51]]
    %v265 = vstv %s264
    %v266 = vmul.f32 %v28, %v265
    %v267 = vmul.f32 %v29, %v265
    %270 = vrot.lane.b32.xlu0 %v266, 127
    %v271 = vpop.permute.xlu0 %270
    %272 = vrot.lane.b32.xlu0 %v267, 127
    %v273 = vpop.permute.xlu0 %272
    %v276 = vadd.f32 %v262, %v271
    %v277 = vadd.f32 %v263, %v273
    %s278 = sld [smem:[#allocation2 + $0x52]]
    %v279 = vstv %s278
    %v280 = vmul.f32 %v28, %v279
    %v281 = vmul.f32 %v29, %v279
    %284 = vrot.lane.b32.xlu0 %v280, 126
    %v285 = vpop.permute.xlu0 %284
    %286 = vrot.lane.b32.xlu0 %v281, 126
    %v287 = vpop.permute.xlu0 %286
    %v290 = vadd.f32 %v276, %v285
    %v291 = vadd.f32 %v277, %v287
    %s292 = sld [smem:[#allocation2 + $0x53]]
    %v293 = vstv %s292
    %v294 = vmul.f32 %v28, %v293
    %v295 = vmul.f32 %v29, %v293
    %298 = vrot.lane.b32.xlu0 %v294, 125
    %v299 = vpop.permute.xlu0 %298
    %300 = vrot.lane.b32.xlu0 %v295, 125
    %v301 = vpop.permute.xlu0 %300
    %v304 = vadd.f32 %v290, %v299
    %v305 = vadd.f32 %v291, %v301
    %v306 = vld [vmem:[%s0 + $0x1] sm:$0x7f]
    %v307 = vld [vmem:[%s0 + $0x11] sm:$0x7f]
    %s308 = sld [smem:[#allocation2 + $0x4]]
    %v309 = vstv %s308
    %v310 = vmul.f32 %v306, %v309
    %v311 = vmul.f32 %v307, %v309
    %v312 = vadd.f32 %v74, %v310
    %v313 = vadd.f32 %v75, %v311
    %s314 = sld [smem:[#allocation2 + $0x5]]
    %v315 = vstv %s314
    %v316 = vmul.f32 %v306, %v315
    %v317 = vmul.f32 %v307, %v315
    %320 = vrot.lane.b32.xlu0 %v316, 127
    %v321 = vpop.permute.xlu0 %320
    %322 = vrot.lane.b32.xlu0 %v317, 127
    %v323 = vpop.permute.xlu0 %322
    %v326 = vadd.f32 %v312, %v321
    %v327 = vadd.f32 %v313, %v323
    %s328 = sld [smem:[#allocation2 + $0x6]]
    %v329 = vstv %s328
    %v330 = vmul.f32 %v306, %v329
    %v331 = vmul.f32 %v307, %v329
    %334 = vrot.lane.b32.xlu0 %v330, 126
    %v335 = vpop.permute.xlu0 %334
    %336 = vrot.lane.b32.xlu0 %v331, 126
    %v337 = vpop.permute.xlu0 %336
    %v340 = vadd.f32 %v326, %v335
    %v341 = vadd.f32 %v327, %v337
    %s342 = sld [smem:[#allocation2 + $0x7]]
    %v343 = vstv %s342
    %v344 = vmul.f32 %v306, %v343
    %v345 = vmul.f32 %v307, %v343
    %348 = vrot.lane.b32.xlu0 %v344, 125
    %v349 = vpop.permute.xlu0 %348
    %350 = vrot.lane.b32.xlu0 %v345, 125
    %v351 = vpop.permute.xlu0 %350
    %v354 = vadd.f32 %v340, %v349
    %v355 = vadd.f32 %v341, %v351
    %s356 = sld [smem:[#allocation2 + $0x14]]
    %v357 = vstv %s356
    %v358 = vmul.f32 %v306, %v357
    %v359 = vmul.f32 %v307, %v357
    %v360 = vadd.f32 %v120, %v358
    %v361 = vadd.f32 %v121, %v359
    %s362 = sld [smem:[#allocation2 + $0x15]]
    %v363 = vstv %s362
    %v364 = vmul.f32 %v306, %v363
    %v365 = vmul.f32 %v307, %v363
    %368 = vrot.lane.b32.xlu0 %v364, 127
    %v369 = vpop.permute.xlu0 %368
    %370 = vrot.lane.b32.xlu0 %v365, 127
    %v371 = vpop.permute.xlu0 %370
    %v374 = vadd.f32 %v360, %v369
    %v375 = vadd.f32 %v361, %v371
    %s376 = sld [smem:[#allocation2 + $0x16]]
    %v377 = vstv %s376
    %v378 = vmul.f32 %v306, %v377
    %v379 = vmul.f32 %v307, %v377
    %382 = vrot.lane.b32.xlu0 %v378, 126
    %v383 = vpop.permute.xlu0 %382
    %384 = vrot.lane.b32.xlu0 %v379, 126
    %v385 = vpop.permute.xlu0 %384
    %v388 = vadd.f32 %v374, %v383
    %v389 = vadd.f32 %v375, %v385
    %s390 = sld [smem:[#allocation2 + $0x17]]
    %v391 = vstv %s390
    %v392 = vmul.f32 %v306, %v391
    %v393 = vmul.f32 %v307, %v391
    %396 = vrot.lane.b32.xlu0 %v392, 125
    %v397 = vpop.permute.xlu0 %396
    %398 = vrot.lane.b32.xlu0 %v393, 125
    %v399 = vpop.permute.xlu0 %398
    %v402 = vadd.f32 %v388, %v397
    %v403 = vadd.f32 %v389, %v399
    %s404 = sld [smem:[#allocation2 + $0x24]]
    %v405 = vstv %s404
    %v406 = vmul.f32 %v306, %v405
    %v407 = vmul.f32 %v307, %v405
    %v408 = vadd.f32 %v166, %v406
    %v409 = vadd.f32 %v167, %v407
    %s410 = sld [smem:[#allocation2 + $0x25]]
    %v411 = vstv %s410
    %v412 = vmul.f32 %v306, %v411
    %v413 = vmul.f32 %v307, %v411
    %416 = vrot.lane.b32.xlu0 %v412, 127
    %v417 = vpop.permute.xlu0 %416
    %418 = vrot.lane.b32.xlu0 %v413, 127
    %v419 = vpop.permute.xlu0 %418
    %v422 = vadd.f32 %v408, %v417
    %v423 = vadd.f32 %v409, %v419
    %s424 = sld [smem:[#allocation2 + $0x26]]
    %v425 = vstv %s424
    %v426 = vmul.f32 %v306, %v425
    %v427 = vmul.f32 %v307, %v425
    %430 = vrot.lane.b32.xlu0 %v426, 126
    %v431 = vpop.permute.xlu0 %430
    %432 = vrot.lane.b32.xlu0 %v427, 126
    %v433 = vpop.permute.xlu0 %432
    %v436 = vadd.f32 %v422, %v431
    %v437 = vadd.f32 %v423, %v433
    %s438 = sld [smem:[#allocation2 + $0x27]]
    %v439 = vstv %s438
    %v440 = vmul.f32 %v306, %v439
    %v441 = vmul.f32 %v307, %v439
    %444 = vrot.lane.b32.xlu0 %v440, 125
    %v445 = vpop.permute.xlu0 %444
    %446 = vrot.lane.b32.xlu0 %v441, 125
    %v447 = vpop.permute.xlu0 %446
    %v450 = vadd.f32 %v436, %v445
    %v451 = vadd.f32 %v437, %v447
    %s452 = sld [smem:[#allocation2 + $0x34]]
    %v453 = vstv %s452
    %v454 = vmul.f32 %v306, %v453
    %v455 = vmul.f32 %v307, %v453
    %v456 = vadd.f32 %v212, %v454
    %v457 = vadd.f32 %v213, %v455
    %s458 = sld [smem:[#allocation2 + $0x35]]
    %v459 = vstv %s458
    %v460 = vmul.f32 %v306, %v459
    %v461 = vmul.f32 %v307, %v459
    %464 = vrot.lane.b32.xlu0 %v460, 127
    %v465 = vpop.permute.xlu0 %464
    %466 = vrot.lane.b32.xlu0 %v461, 127
    %v467 = vpop.permute.xlu0 %466
    %v470 = vadd.f32 %v456, %v465
    %v471 = vadd.f32 %v457, %v467
    %s472 = sld [smem:[#allocation2 + $0x36]]
    %v473 = vstv %s472
    %v474 = vmul.f32 %v306, %v473
    %v475 = vmul.f32 %v307, %v473
    %478 = vrot.lane.b32.xlu0 %v474, 126
    %v479 = vpop.permute.xlu0 %478
    %480 = vrot.lane.b32.xlu0 %v475, 126
    %v481 = vpop.permute.xlu0 %480
    %v484 = vadd.f32 %v470, %v479
    %v485 = vadd.f32 %v471, %v481
    %s486 = sld [smem:[#allocation2 + $0x37]]
    %v487 = vstv %s486
    %v488 = vmul.f32 %v306, %v487
    %v489 = vmul.f32 %v307, %v487
    %492 = vrot.lane.b32.xlu0 %v488, 125
    %v493 = vpop.permute.xlu0 %492
    %494 = vrot.lane.b32.xlu0 %v489, 125
    %v495 = vpop.permute.xlu0 %494
    %v498 = vadd.f32 %v484, %v493
    %v499 = vadd.f32 %v485, %v495
    %s500 = sld [smem:[#allocation2 + $0x44]]
    %v501 = vstv %s500
    %v502 = vmul.f32 %v306, %v501
    %v503 = vmul.f32 %v307, %v501
    %v504 = vadd.f32 %v258, %v502
    %v505 = vadd.f32 %v259, %v503
    %s506 = sld [smem:[#allocation2 + $0x45]]
    %v507 = vstv %s506
    %v508 = vmul.f32 %v306, %v507
    %v509 = vmul.f32 %v307, %v507
    %512 = vrot.lane.b32.xlu0 %v508, 127
    %v513 = vpop.permute.xlu0 %512
    %514 = vrot.lane.b32.xlu0 %v509, 127
    %v515 = vpop.permute.xlu0 %514
    %v518 = vadd.f32 %v504, %v513
    %v519 = vadd.f32 %v505, %v515
    %s520 = sld [smem:[#allocation2 + $0x46]]
    %v521 = vstv %s520
    %v522 = vmul.f32 %v306, %v521
    %v523 = vmul.f32 %v307, %v521
    %526 = vrot.lane.b32.xlu0 %v522, 126
    %v527 = vpop.permute.xlu0 %526
    %528 = vrot.lane.b32.xlu0 %v523, 126
    %v529 = vpop.permute.xlu0 %528
    %v532 = vadd.f32 %v518, %v527
    %v533 = vadd.f32 %v519, %v529
    %s534 = sld [smem:[#allocation2 + $0x47]]
    %v535 = vstv %s534
    %v536 = vmul.f32 %v306, %v535
    %v537 = vmul.f32 %v307, %v535
    %540 = vrot.lane.b32.xlu0 %v536, 125
    %v541 = vpop.permute.xlu0 %540
    %542 = vrot.lane.b32.xlu0 %v537, 125
    %v543 = vpop.permute.xlu0 %542
    %v546 = vadd.f32 %v532, %v541
    %v547 = vadd.f32 %v533, %v543
    %s548 = sld [smem:[#allocation2 + $0x54]]
    %v549 = vstv %s548
    %v550 = vmul.f32 %v306, %v549
    %v551 = vmul.f32 %v307, %v549
    %v552 = vadd.f32 %v304, %v550
    %v553 = vadd.f32 %v305, %v551
    %s554 = sld [smem:[#allocation2 + $0x55]]
    %v555 = vstv %s554
    %v556 = vmul.f32 %v306, %v555
    %v557 = vmul.f32 %v307, %v555
    %560 = vrot.lane.b32.xlu0 %v556, 127
    %v561 = vpop.permute.xlu0 %560
    %562 = vrot.lane.b32.xlu0 %v557, 127
    %v563 = vpop.permute.xlu0 %562
    %v566 = vadd.f32 %v552, %v561
    %v567 = vadd.f32 %v553, %v563
    %s568 = sld [smem:[#allocation2 + $0x56]]
    %v569 = vstv %s568
    %v570 = vmul.f32 %v306, %v569
    %v571 = vmul.f32 %v307, %v569
    %574 = vrot.lane.b32.xlu0 %v570, 126
    %v575 = vpop.permute.xlu0 %574
    %576 = vrot.lane.b32.xlu0 %v571, 126
    %v577 = vpop.permute.xlu0 %576
    %v580 = vadd.f32 %v566, %v575
    %v581 = vadd.f32 %v567, %v577
    %s582 = sld [smem:[#allocation2 + $0x57]]
    %v583 = vstv %s582
    %v584 = vmul.f32 %v306, %v583
    %v585 = vmul.f32 %v307, %v583
    %588 = vrot.lane.b32.xlu0 %v584, 125
    %v589 = vpop.permute.xlu0 %588
    %590 = vrot.lane.b32.xlu0 %v585, 125
    %v591 = vpop.permute.xlu0 %590
    %v594 = vadd.f32 %v580, %v589
    %v595 = vadd.f32 %v581, %v591
    %v596 = vld [vmem:[%s0 + $0x2] sm:$0x7f]
    %v597 = vld [vmem:[%s0 + $0x12] sm:$0x7f]
    %s598 = sld [smem:[#allocation2 + $0x8]]
    %v599 = vstv %s598
    %v600 = vmul.f32 %v596, %v599
    %v601 = vmul.f32 %v597, %v599
    %v602 = vadd.f32 %v354, %v600
    %v603 = vadd.f32 %v355, %v601
    %s604 = sld [smem:[#allocation2 + $0x9]]
    %v605 = vstv %s604
    %v606 = vmul.f32 %v596, %v605
    %v607 = vmul.f32 %v597, %v605
    %610 = vrot.lane.b32.xlu0 %v606, 127
    %v611 = vpop.permute.xlu0 %610
    %612 = vrot.lane.b32.xlu0 %v607, 127
    %v613 = vpop.permute.xlu0 %612
    %v616 = vadd.f32 %v602, %v611
    %v617 = vadd.f32 %v603, %v613
    %s618 = sld [smem:[#allocation2 + $0xa]]
    %v619 = vstv %s618
    %v620 = vmul.f32 %v596, %v619
    %v621 = vmul.f32 %v597, %v619
    %624 = vrot.lane.b32.xlu0 %v620, 126
    %v625 = vpop.permute.xlu0 %624
    %626 = vrot.lane.b32.xlu0 %v621, 126
    %v627 = vpop.permute.xlu0 %626
    %v630 = vadd.f32 %v616, %v625
    %v631 = vadd.f32 %v617, %v627
    %s632 = sld [smem:[#allocation2 + $0xb]]
    %v633 = vstv %s632
    %v634 = vmul.f32 %v596, %v633
    %v635 = vmul.f32 %v597, %v633
    %638 = vrot.lane.b32.xlu0 %v634, 125
    %v639 = vpop.permute.xlu0 %638
    %640 = vrot.lane.b32.xlu0 %v635, 125
    %v641 = vpop.permute.xlu0 %640
    %v644 = vadd.f32 %v630, %v639
    %v645 = vadd.f32 %v631, %v641
    %s646 = sld [smem:[#allocation2 + $0x18]]
    %v647 = vstv %s646
    %v648 = vmul.f32 %v596, %v647
    %v649 = vmul.f32 %v597, %v647
    %v650 = vadd.f32 %v402, %v648
    %v651 = vadd.f32 %v403, %v649
    %s652 = sld [smem:[#allocation2 + $0x19]]
    %v653 = vstv %s652
    %v654 = vmul.f32 %v596, %v653
    %v655 = vmul.f32 %v597, %v653
    %658 = vrot.lane.b32.xlu0 %v654, 127
    %v659 = vpop.permute.xlu0 %658
    %660 = vrot.lane.b32.xlu0 %v655, 127
    %v661 = vpop.permute.xlu0 %660
    %v664 = vadd.f32 %v650, %v659
    %v665 = vadd.f32 %v651, %v661
    %s666 = sld [smem:[#allocation2 + $0x1a]]
    %v667 = vstv %s666
    %v668 = vmul.f32 %v596, %v667
    %v669 = vmul.f32 %v597, %v667
    %672 = vrot.lane.b32.xlu0 %v668, 126
    %v673 = vpop.permute.xlu0 %672
    %674 = vrot.lane.b32.xlu0 %v669, 126
    %v675 = vpop.permute.xlu0 %674
    %v678 = vadd.f32 %v664, %v673
    %v679 = vadd.f32 %v665, %v675
    %s680 = sld [smem:[#allocation2 + $0x1b]]
    %v681 = vstv %s680
    %v682 = vmul.f32 %v596, %v681
    %v683 = vmul.f32 %v597, %v681
    %686 = vrot.lane.b32.xlu0 %v682, 125
    %v687 = vpop.permute.xlu0 %686
    %688 = vrot.lane.b32.xlu0 %v683, 125
    %v689 = vpop.permute.xlu0 %688
    %v692 = vadd.f32 %v678, %v687
    %v693 = vadd.f32 %v679, %v689
    %s694 = sld [smem:[#allocation2 + $0x28]]
    %v695 = vstv %s694
    %v696 = vmul.f32 %v596, %v695
    %v697 = vmul.f32 %v597, %v695
    %v698 = vadd.f32 %v450, %v696
    %v699 = vadd.f32 %v451, %v697
    %s700 = sld [smem:[#allocation2 + $0x29]]
    %v701 = vstv %s700
    %v702 = vmul.f32 %v596, %v701
    %v703 = vmul.f32 %v597, %v701
    %706 = vrot.lane.b32.xlu0 %v702, 127
    %v707 = vpop.permute.xlu0 %706
    %708 = vrot.lane.b32.xlu0 %v703, 127
    %v709 = vpop.permute.xlu0 %708
    %v712 = vadd.f32 %v698, %v707
    %v713 = vadd.f32 %v699, %v709
    %s714 = sld [smem:[#allocation2 + $0x2a]]
    %v715 = vstv %s714
    %v716 = vmul.f32 %v596, %v715
    %v717 = vmul.f32 %v597, %v715
    %720 = vrot.lane.b32.xlu0 %v716, 126
    %v721 = vpop.permute.xlu0 %720
    %722 = vrot.lane.b32.xlu0 %v717, 126
    %v723 = vpop.permute.xlu0 %722
    %v726 = vadd.f32 %v712, %v721
    %v727 = vadd.f32 %v713, %v723
    %s728 = sld [smem:[#allocation2 + $0x2b]]
    %v729 = vstv %s728
    %v730 = vmul.f32 %v596, %v729
    %v731 = vmul.f32 %v597, %v729
    %734 = vrot.lane.b32.xlu0 %v730, 125
    %v735 = vpop.permute.xlu0 %734
    %736 = vrot.lane.b32.xlu0 %v731, 125
    %v737 = vpop.permute.xlu0 %736
    %v740 = vadd.f32 %v726, %v735
    %v741 = vadd.f32 %v727, %v737
    %s742 = sld [smem:[#allocation2 + $0x38]]
    %v743 = vstv %s742
    %v744 = vmul.f32 %v596, %v743
    %v745 = vmul.f32 %v597, %v743
    %v746 = vadd.f32 %v498, %v744
    %v747 = vadd.f32 %v499, %v745
    %s748 = sld [smem:[#allocation2 + $0x39]]
    %v749 = vstv %s748
    %v750 = vmul.f32 %v596, %v749
    %v751 = vmul.f32 %v597, %v749
    %754 = vrot.lane.b32.xlu0 %v750, 127
    %v755 = vpop.permute.xlu0 %754
    %756 = vrot.lane.b32.xlu0 %v751, 127
    %v757 = vpop.permute.xlu0 %756
    %v760 = vadd.f32 %v746, %v755
    %v761 = vadd.f32 %v747, %v757
    %s762 = sld [smem:[#allocation2 + $0x3a]]
    %v763 = vstv %s762
    %v764 = vmul.f32 %v596, %v763
    %v765 = vmul.f32 %v597, %v763
    %768 = vrot.lane.b32.xlu0 %v764, 126
    %v769 = vpop.permute.xlu0 %768
    %770 = vrot.lane.b32.xlu0 %v765, 126
    %v771 = vpop.permute.xlu0 %770
    %v774 = vadd.f32 %v760, %v769
    %v775 = vadd.f32 %v761, %v771
    %s776 = sld [smem:[#allocation2 + $0x3b]]
    %v777 = vstv %s776
    %v778 = vmul.f32 %v596, %v777
    %v779 = vmul.f32 %v597, %v777
    %782 = vrot.lane.b32.xlu0 %v778, 125
    %v783 = vpop.permute.xlu0 %782
    %784 = vrot.lane.b32.xlu0 %v779, 125
    %v785 = vpop.permute.xlu0 %784
    %v788 = vadd.f32 %v774, %v783
    %v789 = vadd.f32 %v775, %v785
    %s790 = sld [smem:[#allocation2 + $0x48]]
    %v791 = vstv %s790
    %v792 = vmul.f32 %v596, %v791
    %v793 = vmul.f32 %v597, %v791
    %v794 = vadd.f32 %v546, %v792
    %v795 = vadd.f32 %v547, %v793
    %s796 = sld [smem:[#allocation2 + $0x49]]
    %v797 = vstv %s796
    %v798 = vmul.f32 %v596, %v797
    %v799 = vmul.f32 %v597, %v797
    %802 = vrot.lane.b32.xlu0 %v798, 127
    %v803 = vpop.permute.xlu0 %802
    %804 = vrot.lane.b32.xlu0 %v799, 127
    %v805 = vpop.permute.xlu0 %804
    %v808 = vadd.f32 %v794, %v803
    %v809 = vadd.f32 %v795, %v805
    %s810 = sld [smem:[#allocation2 + $0x4a]]
    %v811 = vstv %s810
    %v812 = vmul.f32 %v596, %v811
    %v813 = vmul.f32 %v597, %v811
    %816 = vrot.lane.b32.xlu0 %v812, 126
    %v817 = vpop.permute.xlu0 %816
    %818 = vrot.lane.b32.xlu0 %v813, 126
    %v819 = vpop.permute.xlu0 %818
    %v822 = vadd.f32 %v808, %v817
    %v823 = vadd.f32 %v809, %v819
    %s824 = sld [smem:[#allocation2 + $0x4b]]
    %v825 = vstv %s824
    %v826 = vmul.f32 %v596, %v825
    %v827 = vmul.f32 %v597, %v825
    %830 = vrot.lane.b32.xlu0 %v826, 125
    %v831 = vpop.permute.xlu0 %830
    %832 = vrot.lane.b32.xlu0 %v827, 125
    %v833 = vpop.permute.xlu0 %832
    %v836 = vadd.f32 %v822, %v831
    %v837 = vadd.f32 %v823, %v833
    %s838 = sld [smem:[#allocation2 + $0x58]]
    %v839 = vstv %s838
    %v840 = vmul.f32 %v596, %v839
    %v841 = vmul.f32 %v597, %v839
    %v842 = vadd.f32 %v594, %v840
    %v843 = vadd.f32 %v595, %v841
    %s844 = sld [smem:[#allocation2 + $0x59]]
    %v845 = vstv %s844
    %v846 = vmul.f32 %v596, %v845
    %v847 = vmul.f32 %v597, %v845
    %850 = vrot.lane.b32.xlu0 %v846, 127
    %v851 = vpop.permute.xlu0 %850
    %852 = vrot.lane.b32.xlu0 %v847, 127
    %v853 = vpop.permute.xlu0 %852
    %v856 = vadd.f32 %v842, %v851
    %v857 = vadd.f32 %v843, %v853
    %s858 = sld [smem:[#allocation2 + $0x5a]]
    %v859 = vstv %s858
    %v860 = vmul.f32 %v596, %v859
    %v861 = vmul.f32 %v597, %v859
    %864 = vrot.lane.b32.xlu0 %v860, 126
    %v865 = vpop.permute.xlu0 %864
    %866 = vrot.lane.b32.xlu0 %v861, 126
    %v867 = vpop.permute.xlu0 %866
    %v870 = vadd.f32 %v856, %v865
    %v871 = vadd.f32 %v857, %v867
    %s872 = sld [smem:[#allocation2 + $0x5b]]
    %v873 = vstv %s872
    %v874 = vmul.f32 %v596, %v873
    %v875 = vmul.f32 %v597, %v873
    %878 = vrot.lane.b32.xlu0 %v874, 125
    %v879 = vpop.permute.xlu0 %878
    %880 = vrot.lane.b32.xlu0 %v875, 125
    %v881 = vpop.permute.xlu0 %880
    %v884 = vadd.f32 %v870, %v879
    %v885 = vadd.f32 %v871, %v881
    %v886 = vld [vmem:[%s0 + $0x3] sm:$0x7f]
    %v887 = vld [vmem:[%s0 + $0x13] sm:$0x7f]
    %s888 = sld [smem:[#allocation2 + $0xc]]
    %v889 = vstv %s888
    %v890 = vmul.f32 %v886, %v889
    %v891 = vmul.f32 %v887, %v889
    %v892 = vadd.f32 %v644, %v890
    %v893 = vadd.f32 %v645, %v891
    %s894 = sld [smem:[#allocation2 + $0xd]]
    %v895 = vstv %s894
    %v896 = vmul.f32 %v886, %v895
    %v897 = vmul.f32 %v887, %v895
    %900 = vrot.lane.b32.xlu0 %v896, 127
    %v901 = vpop.permute.xlu0 %900
    %902 = vrot.lane.b32.xlu0 %v897, 127
    %v903 = vpop.permute.xlu0 %902
    %v906 = vadd.f32 %v892, %v901
    %v907 = vadd.f32 %v893, %v903
    %s908 = sld [smem:[#allocation2 + $0xe]]
    %v909 = vstv %s908
    %v910 = vmul.f32 %v886, %v909
    %v911 = vmul.f32 %v887, %v909
    %914 = vrot.lane.b32.xlu0 %v910, 126
    %v915 = vpop.permute.xlu0 %914
    %916 = vrot.lane.b32.xlu0 %v911, 126
    %v917 = vpop.permute.xlu0 %916
    %v920 = vadd.f32 %v906, %v915
    %v921 = vadd.f32 %v907, %v917
    %s922 = sld [smem:[#allocation2 + $0xf]]
    %v923 = vstv %s922
    %v924 = vmul.f32 %v886, %v923
    %v925 = vmul.f32 %v887, %v923
    %928 = vrot.lane.b32.xlu0 %v924, 125
    %v929 = vpop.permute.xlu0 %928
    %930 = vrot.lane.b32.xlu0 %v925, 125
    %v931 = vpop.permute.xlu0 %930
    %v934 = vadd.f32 %v920, %v929
    %v935 = vadd.f32 %v921, %v931
    %s936 = sld [smem:[#allocation2 + $0x1c]]
    %v937 = vstv %s936
    %v938 = vmul.f32 %v886, %v937
    %v939 = vmul.f32 %v887, %v937
    %v940 = vadd.f32 %v692, %v938
    %v941 = vadd.f32 %v693, %v939
    %s942 = sld [smem:[#allocation2 + $0x1d]]
    %v943 = vstv %s942
    %v944 = vmul.f32 %v886, %v943
    %v945 = vmul.f32 %v887, %v943
    %948 = vrot.lane.b32.xlu0 %v944, 127
    %v949 = vpop.permute.xlu0 %948
    %950 = vrot.lane.b32.xlu0 %v945, 127
    %v951 = vpop.permute.xlu0 %950
    %v954 = vadd.f32 %v940, %v949
    %v955 = vadd.f32 %v941, %v951
    %s956 = sld [smem:[#allocation2 + $0x1e]]
    %v957 = vstv %s956
    %v958 = vmul.f32 %v886, %v957
    %v959 = vmul.f32 %v887, %v957
    %962 = vrot.lane.b32.xlu0 %v958, 126
    %v963 = vpop.permute.xlu0 %962
    %964 = vrot.lane.b32.xlu0 %v959, 126
    %v965 = vpop.permute.xlu0 %964
    %v968 = vadd.f32 %v954, %v963
    %v969 = vadd.f32 %v955, %v965
    %s970 = sld [smem:[#allocation2 + $0x1f]]
    %v971 = vstv %s970
    %v972 = vmul.f32 %v886, %v971
    %v973 = vmul.f32 %v887, %v971
    %976 = vrot.lane.b32.xlu0 %v972, 125
    %v977 = vpop.permute.xlu0 %976
    %978 = vrot.lane.b32.xlu0 %v973, 125
    %v979 = vpop.permute.xlu0 %978
    %v982 = vadd.f32 %v968, %v977
    %v983 = vadd.f32 %v969, %v979
    %s984 = sld [smem:[#allocation2 + $0x2c]]
    %v985 = vstv %s984
    %v986 = vmul.f32 %v886, %v985
    %v987 = vmul.f32 %v887, %v985
    %v988 = vadd.f32 %v740, %v986
    %v989 = vadd.f32 %v741, %v987
    %s990 = sld [smem:[#allocation2 + $0x2d]]
    %v991 = vstv %s990
    %v992 = vmul.f32 %v886, %v991
    %v993 = vmul.f32 %v887, %v991
    %996 = vrot.lane.b32.xlu0 %v992, 127
    %v997 = vpop.permute.xlu0 %996
    %998 = vrot.lane.b32.xlu0 %v993, 127
    %v999 = vpop.permute.xlu0 %998
    %v1002 = vadd.f32 %v988, %v997
    %v1003 = vadd.f32 %v989, %v999
    %s1004 = sld [smem:[#allocation2 + $0x2e]]
    %v1005 = vstv %s1004
    %v1006 = vmul.f32 %v886, %v1005
    %v1007 = vmul.f32 %v887, %v1005
    %1010 = vrot.lane.b32.xlu0 %v1006, 126
    %v1011 = vpop.permute.xlu0 %1010
    %1012 = vrot.lane.b32.xlu0 %v1007, 126
    %v1013 = vpop.permute.xlu0 %1012
    %v1016 = vadd.f32 %v1002, %v1011
    %v1017 = vadd.f32 %v1003, %v1013
    %s1018 = sld [smem:[#allocation2 + $0x2f]]
    %v1019 = vstv %s1018
    %v1020 = vmul.f32 %v886, %v1019
    %v1021 = vmul.f32 %v887, %v1019
    %1024 = vrot.lane.b32.xlu0 %v1020, 125
    %v1025 = vpop.permute.xlu0 %1024
    %1026 = vrot.lane.b32.xlu0 %v1021, 125
    %v1027 = vpop.permute.xlu0 %1026
    %v1030 = vadd.f32 %v1016, %v1025
    %v1031 = vadd.f32 %v1017, %v1027
    %s1032 = sld [smem:[#allocation2 + $0x3c]]
    %v1033 = vstv %s1032
    %v1034 = vmul.f32 %v886, %v1033
    %v1035 = vmul.f32 %v887, %v1033
    %v1036 = vadd.f32 %v788, %v1034
    %v1037 = vadd.f32 %v789, %v1035
    %s1038 = sld [smem:[#allocation2 + $0x3d]]
    %v1039 = vstv %s1038
    %v1040 = vmul.f32 %v886, %v1039
    %v1041 = vmul.f32 %v887, %v1039
    %1044 = vrot.lane.b32.xlu0 %v1040, 127
    %v1045 = vpop.permute.xlu0 %1044
    %1046 = vrot.lane.b32.xlu0 %v1041, 127
    %v1047 = vpop.permute.xlu0 %1046
    %v1050 = vadd.f32 %v1036, %v1045
    %v1051 = vadd.f32 %v1037, %v1047
    %s1052 = sld [smem:[#allocation2 + $0x3e]]
    %v1053 = vstv %s1052
    %v1054 = vmul.f32 %v886, %v1053
    %v1055 = vmul.f32 %v887, %v1053
    %1058 = vrot.lane.b32.xlu0 %v1054, 126
    %v1059 = vpop.permute.xlu0 %1058
    %1060 = vrot.lane.b32.xlu0 %v1055, 126
    %v1061 = vpop.permute.xlu0 %1060
    %v1064 = vadd.f32 %v1050, %v1059
    %v1065 = vadd.f32 %v1051, %v1061
    %s1066 = sld [smem:[#allocation2 + $0x3f]]
    %v1067 = vstv %s1066
    %v1068 = vmul.f32 %v886, %v1067
    %v1069 = vmul.f32 %v887, %v1067
    %1072 = vrot.lane.b32.xlu0 %v1068, 125
    %v1073 = vpop.permute.xlu0 %1072
    %1074 = vrot.lane.b32.xlu0 %v1069, 125
    %v1075 = vpop.permute.xlu0 %1074
    %v1078 = vadd.f32 %v1064, %v1073
    %v1079 = vadd.f32 %v1065, %v1075
    %s1080 = sld [smem:[#allocation2 + $0x4c]]
    %v1081 = vstv %s1080
    %v1082 = vmul.f32 %v886, %v1081
    %v1083 = vmul.f32 %v887, %v1081
    %v1084 = vadd.f32 %v836, %v1082
    %v1085 = vadd.f32 %v837, %v1083
    %s1086 = sld [smem:[#allocation2 + $0x4d]]
    %v1087 = vstv %s1086
    %v1088 = vmul.f32 %v886, %v1087
    %v1089 = vmul.f32 %v887, %v1087
    %1092 = vrot.lane.b32.xlu0 %v1088, 127
    %v1093 = vpop.permute.xlu0 %1092
    %1094 = vrot.lane.b32.xlu0 %v1089, 127
    %v1095 = vpop.permute.xlu0 %1094
    %v1098 = vadd.f32 %v1084, %v1093
    %v1099 = vadd.f32 %v1085, %v1095
    %s1100 = sld [smem:[#allocation2 + $0x4e]]
    %v1101 = vstv %s1100
    %v1102 = vmul.f32 %v886, %v1101
    %v1103 = vmul.f32 %v887, %v1101
    %1106 = vrot.lane.b32.xlu0 %v1102, 126
    %v1107 = vpop.permute.xlu0 %1106
    %1108 = vrot.lane.b32.xlu0 %v1103, 126
    %v1109 = vpop.permute.xlu0 %1108
    %v1112 = vadd.f32 %v1098, %v1107
    %v1113 = vadd.f32 %v1099, %v1109
    %s1114 = sld [smem:[#allocation2 + $0x4f]]
    %v1115 = vstv %s1114
    %v1116 = vmul.f32 %v886, %v1115
    %v1117 = vmul.f32 %v887, %v1115
    %1120 = vrot.lane.b32.xlu0 %v1116, 125
    %v1121 = vpop.permute.xlu0 %1120
    %1122 = vrot.lane.b32.xlu0 %v1117, 125
    %v1123 = vpop.permute.xlu0 %1122
    %v1126 = vadd.f32 %v1112, %v1121
    %v1127 = vadd.f32 %v1113, %v1123
    %s1128 = sld [smem:[#allocation2 + $0x5c]]
    %v1129 = vstv %s1128
    %v1130 = vmul.f32 %v886, %v1129
    %v1131 = vmul.f32 %v887, %v1129
    %v1132 = vadd.f32 %v884, %v1130
    %v1133 = vadd.f32 %v885, %v1131
    %s1134 = sld [smem:[#allocation2 + $0x5d]]
    %v1135 = vstv %s1134
    %v1136 = vmul.f32 %v886, %v1135
    %v1137 = vmul.f32 %v887, %v1135
    %1140 = vrot.lane.b32.xlu0 %v1136, 127
    %v1141 = vpop.permute.xlu0 %1140
    %1142 = vrot.lane.b32.xlu0 %v1137, 127
    %v1143 = vpop.permute.xlu0 %1142
    %v1146 = vadd.f32 %v1132, %v1141
    %v1147 = vadd.f32 %v1133, %v1143
    %s1148 = sld [smem:[#allocation2 + $0x5e]]
    %v1149 = vstv %s1148
    %v1150 = vmul.f32 %v886, %v1149
    %v1151 = vmul.f32 %v887, %v1149
    %1154 = vrot.lane.b32.xlu0 %v1150, 126
    %v1155 = vpop.permute.xlu0 %1154
    %1156 = vrot.lane.b32.xlu0 %v1151, 126
    %v1157 = vpop.permute.xlu0 %1156
    %v1160 = vadd.f32 %v1146, %v1155
    %v1161 = vadd.f32 %v1147, %v1157
    %s1162 = sld [smem:[#allocation2 + $0x5f]]
    %v1163 = vstv %s1162
    %v1164 = vmul.f32 %v886, %v1163
    %v1165 = vmul.f32 %v887, %v1163
    %1168 = vrot.lane.b32.xlu0 %v1164, 125
    %v1169 = vpop.permute.xlu0 %1168
    %1170 = vrot.lane.b32.xlu0 %v1165, 125
    %v1171 = vpop.permute.xlu0 %1170
    %v1174 = vadd.f32 %v1160, %v1169
    %v1175 = vadd.f32 %v1161, %v1171
    %s1176 = sld [smem:[#allocation2 + $0x60]]
    %v1177 = vstv %s1176
    %v1178 = vadd.f32 %v934, %v1177
    %v1179 = vadd.f32 %v935, %v1177
    %v1180 = vmax.f32 %v1178, 0.0
    %v1181 = vmax.f32 %v1179, 0.0
    %v1184 = vrot.slane %v1180, 1
    %v1185 = vrot.slane %v1181, 1
    %v1188 = vmax.f32 %v1180, %v1184
    %v1189 = vmax.f32 %v1181, %v1185
    %1192 = vrot.lane.b32.xlu0 %v1188, 127
    %v1193 = vpop.permute.xlu0 %1192
    %1194 = vrot.lane.b32.xlu0 %v1189, 127
    %v1195 = vpop.permute.xlu0 %1194
    %v1198 = vmax.f32 %v1188, %v1193
    %v1199 = vmax.f32 %v1189, %v1195
    %s1200 = sld [smem:[#allocation2 + $0x61]]
    %v1201 = vstv %s1200
    %v1202 = vadd.f32 %v982, %v1201
    %v1203 = vadd.f32 %v983, %v1201
    %v1204 = vmax.f32 %v1202, 0.0
    %v1205 = vmax.f32 %v1203, 0.0
    %v1208 = vrot.slane %v1204, 1
    %v1209 = vrot.slane %v1205, 1
    %v1212 = vmax.f32 %v1204, %v1208
    %v1213 = vmax.f32 %v1205, %v1209
    %1216 = vrot.lane.b32.xlu0 %v1212, 127
    %v1217 = vpop.permute.xlu0 %1216
    %1218 = vrot.lane.b32.xlu0 %v1213, 127
    %v1219 = vpop.permute.xlu0 %1218
    %v1222 = vmax.f32 %v1212, %v1217
    %v1223 = vmax.f32 %v1213, %v1219
    %s1224 = sld [smem:[#allocation2 + $0x62]]
    %v1225 = vstv %s1224
    %v1226 = vadd.f32 %v1030, %v1225
    %v1227 = vadd.f32 %v1031, %v1225
    %v1228 = vmax.f32 %v1226, 0.0
    %v1229 = vmax.f32 %v1227, 0.0
    %v1232 = vrot.slane %v1228, 1
    %v1233 = vrot.slane %v1229, 1
    %v1236 = vmax.f32 %v1228, %v1232
    %v1237 = vmax.f32 %v1229, %v1233
    %1240 = vrot.lane.b32.xlu0 %v1236, 127
    %v1241 = vpop.permute.xlu0 %1240
    %1242 = vrot.lane.b32.xlu0 %v1237, 127
    %v1243 = vpop.permute.xlu0 %1242
    %v1246 = vmax.f32 %v1236, %v1241
    %v1247 = vmax.f32 %v1237, %v1243
    %s1248 = sld [smem:[#allocation2 + $0x63]]
    %v1249 = vstv %s1248
    %v1250 = vadd.f32 %v1078, %v1249
    %v1251 = vadd.f32 %v1079, %v1249
    %v1252 = vmax.f32 %v1250, 0.0
    %v1253 = vmax.f32 %v1251, 0.0
    %v1256 = vrot.slane %v1252, 1
    %v1257 = vrot.slane %v1253, 1
    %v1260 = vmax.f32 %v1252, %v1256
    %v1261 = vmax.f32 %v1253, %v1257
    %1264 = vrot.lane.b32.xlu0 %v1260, 127
    %v1265 = vpop.permute.xlu0 %1264
    %1266 = vrot.lane.b32.xlu0 %v1261, 127
    %v1267 = vpop.permute.xlu0 %1266
    %v1270 = vmax.f32 %v1260, %v1265
    %v1271 = vmax.f32 %v1261, %v1267
    %s1272 = sld [smem:[#allocation2 + $0x64]]
    %v1273 = vstv %s1272
    %v1274 = vadd.f32 %v1126, %v1273
    %v1275 = vadd.f32 %v1127, %v1273
    %v1276 = vmax.f32 %v1274, 0.0
    %v1277 = vmax.f32 %v1275, 0.0
    %v1280 = vrot.slane %v1276, 1
    %v1281 = vrot.slane %v1277, 1
    %v1284 = vmax.f32 %v1276, %v1280
    %v1285 = vmax.f32 %v1277, %v1281
    %1288 = vrot.lane.b32.xlu0 %v1284, 127
    %v1289 = vpop.permute.xlu0 %1288
    %1290 = vrot.lane.b32.xlu0 %v1285, 127
    %v1291 = vpop.permute.xlu0 %1290
    %v1294 = vmax.f32 %v1284, %v1289
    %v1295 = vmax.f32 %v1285, %v1291
    %s1296 = sld [smem:[#allocation2 + $0x65]]
    %v1297 = vstv %s1296
    %v1298 = vadd.f32 %v1174, %v1297
    %v1299 = vadd.f32 %v1175, %v1297
    %v1300 = vmax.f32 %v1298, 0.0
    %v1301 = vmax.f32 %v1299, 0.0
    %v1304 = vrot.slane %v1300, 1
    %v1305 = vrot.slane %v1301, 1
    %v1308 = vmax.f32 %v1300, %v1304
    %v1309 = vmax.f32 %v1301, %v1305
    %1312 = vrot.lane.b32.xlu0 %v1308, 127
    %v1313 = vpop.permute.xlu0 %1312
    %1314 = vrot.lane.b32.xlu0 %v1309, 127
    %v1315 = vpop.permute.xlu0 %1314
    %v1318 = vmax.f32 %v1308, %v1313
    %v1319 = vmax.f32 %v1309, %v1315
    %v1322 = vrot.slane %v1199, 7
    %vm1323 = vcmask 1041409
    %v1324 = vsel %vm1323, %v1322, %v1198
    %v1326 = vrot.slane %v1198, 2
    %v1327 = vrot.slane %v1199, 1
    %v1328 = vsel %vm1323, %v1327, %v1326
    %1329 = vrot.lane.b32.xlu0 %v1328, 6
    %v1330 = vpop.permute.xlu0 %1329
    %v1332 = vrot.slane %v1198, 4
    %v1333 = vrot.slane %v1199, 3
    %v1334 = vsel %vm1323, %v1333, %v1332
    %1335 = vrot.lane.b32.xlu0 %v1334, 12
    %v1336 = vpop.permute.xlu0 %1335
    %v1340 = vrot.slane %v1223, 7
    %v1341 = vsel %vm1323, %v1340, %v1222
    %1342 = vrot.lane.b32.xlu0 %v1341, 18
    %v1343 = vpop.permute.xlu0 %1342
    %v1345 = vrot.slane %v1222, 2
    %v1346 = vrot.slane %v1223, 1
    %v1347 = vsel %vm1323, %v1346, %v1345
    %1348 = vrot.lane.b32.xlu0 %v1347, 24
    %v1349 = vpop.permute.xlu0 %1348
    %v1351 = vrot.slane %v1222, 4
    %v1352 = vrot.slane %v1223, 3
    %v1353 = vsel %vm1323, %v1352, %v1351
    %1354 = vrot.lane.b32.xlu0 %v1353, 30
    %v1355 = vpop.permute.xlu0 %1354
    %v1359 = vrot.slane %v1247, 7
    %v1360 = vsel %vm1323, %v1359, %v1246
    %1361 = vrot.lane.b32.xlu0 %v1360, 36
    %v1362 = vpop.permute.xlu0 %1361
    %v1364 = vrot.slane %v1246, 2
    %v1365 = vrot.slane %v1247, 1
    %v1366 = vsel %vm1323, %v1365, %v1364
    %1367 = vrot.lane.b32.xlu0 %v1366, 42
    %v1368 = vpop.permute.xlu0 %1367
    %v1370 = vrot.slane %v1246, 4
    %v1371 = vrot.slane %v1247, 3
    %v1372 = vsel %vm1323, %v1371, %v1370
    %1373 = vrot.lane.b32.xlu0 %v1372, 48
    %v1374 = vpop.permute.xlu0 %1373
    %v1378 = vrot.slane %v1271, 7
    %v1379 = vsel %vm1323, %v1378, %v1270
    %1380 = vrot.lane.b32.xlu0 %v1379, 54
    %v1381 = vpop.permute.xlu0 %1380
    %v1383 = vrot.slane %v1270, 2
    %v1384 = vrot.slane %v1271, 1
    %v1385 = vsel %vm1323, %v1384, %v1383
    %1386 = vrot.lane.b32.xlu0 %v1385, 60
    %v1387 = vpop.permute.xlu0 %1386
    %v1389 = vrot.slane %v1270, 4
    %v1390 = vrot.slane %v1271, 3
    %v1391 = vsel %vm1323, %v1390, %v1389
    %1392 = vrot.lane.b32.xlu0 %v1391, 66
    %v1393 = vpop.permute.xlu0 %1392
    %v1397 = vrot.slane %v1295, 7
    %v1398 = vsel %vm1323, %v1397, %v1294
    %1399 = vrot.lane.b32.xlu0 %v1398, 72
    %v1400 = vpop.permute.xlu0 %1399
    %v1402 = vrot.slane %v1294, 2
    %v1403 = vrot.slane %v1295, 1
    %v1404 = vsel %vm1323, %v1403, %v1402
    %1405 = vrot.lane.b32.xlu0 %v1404, 78
    %v1406 = vpop.permute.xlu0 %1405
    %v1408 = vrot.slane %v1294, 4
    %v1409 = vrot.slane %v1295, 3
    %v1410 = vsel %vm1323, %v1409, %v1408
    %1411 = vrot.lane.b32.xlu0 %v1410, 84
    %v1412 = vpop.permute.xlu0 %1411
    %v1416 = vrot.slane %v1319, 7
    %v1417 = vsel %vm1323, %v1416, %v1318
    %1418 = vrot.lane.b32.xlu0 %v1417, 90
    %v1419 = vpop.permute.xlu0 %1418
    %vm1421 = vcmask 48128
    %v1422 = vsel %vm1421, %v1324, %v1330
    %vm1423 = vcmask 97280
    %v1424 = vsel %vm1423, %v1422, %v1336
    %vm1425 = vcmask 146432
    %v1426 = vsel %vm1425, %v1424, %v1343
    %vm1427 = vcmask 195584
    %v1428 = vsel %vm1427, %v1426, %v1349
    %vm1429 = vcmask 244736
    %v1430 = vsel %vm1429, %v1428, %v1355
    %vm1431 = vcmask 293888
    %v1432 = vsel %vm1431, %v1430, %v1362
    %vm1433 = vcmask 343040
    %v1434 = vsel %vm1433, %v1432, %v1368
    %vm1435 = vcmask 392192
    %v1436 = vsel %vm1435, %v1434, %v1374
    %vm1437 = vcmask 441344
    %v1438 = vsel %vm1437, %v1436, %v1381
    %vm1439 = vcmask 490496
    %v1440 = vsel %vm1439, %v1438, %v1387
    %vm1441 = vcmask 539648
    %v1442 = vsel %vm1441, %v1440, %v1393
    %vm1443 = vcmask 588800
    %v1444 = vsel %vm1443, %v1442, %v1400
    %vm1445 = vcmask 637952
    %v1446 = vsel %vm1445, %v1444, %v1406
    %vm1447 = vcmask 687104
    %v1448 = vsel %vm1447, %v1446, %v1412
    %vm1449 = vcmask 736256
    %v1450 = vsel %vm1449, %v1448, %v1419
    %vm1451 = vcmask 1043459
    %v1452 = vsel %vm1451, %v1416, %v1318
    %v1454 = vrot.slane %v1318, 2
    %v1455 = vrot.slane %v1319, 1
    %v1456 = vsel %vm1451, %v1455, %v1454
    %1457 = vrot.lane.b32.xlu0 %v1456, 6
    %v1458 = vpop.permute.xlu0 %1457
    %v1460 = vsel %vm1421, %v1452, %v1458
    %v1462 = vrot.slane %v1460, 2
    %1463 = vrot.lane.b32.xlu0 %v1462, 96
    %v1464 = vpop.permute.xlu0 %1463
    %vm1466 = vcmask 785408
    %v1467 = vsel %vm1466, %v1450, %v1464
    %v1468 = vld [vmem:[%s2] sm:$0xff]
    %v1469 = vld [vmem:[%s2 + $0x8] sm:$0xff]
    %v1470 = vld [vmem:[%s2 + $0x10] sm:$0xff]
    %v1471 = vld [vmem:[%s2 + $0x18] sm:$0xff]
    %v1472 = vld [vmem:[%s2 + $0x20] sm:$0xff]
    %v1473 = vld [vmem:[%s2 + $0x28] sm:$0xff]
    %v1474 = vld [vmem:[%s2 + $0x30] sm:$0xff]
    %v1475 = vld [vmem:[%s2 + $0x38] sm:$0xff]
    %v1476 = vld [vmem:[%s2 + $0x40] sm:$0xff]
    %v1477 = vld [vmem:[%s2 + $0x48] sm:$0xff]
    %v1478 = vld [vmem:[%s2 + $0x50] sm:$0xff]
    %v1479 = vld [vmem:[%s2 + $0x58] sm:$0xff]
    %v1480 = vld [vmem:[%s2 + $0x60] sm:$0xff]
    %v1481 = vld [vmem:[%s2 + $0x68] sm:$0xf]
    %v1482 = vld [vmem:[%s2 + $0x6c] sm:$0x1]
    %v1483 = vlaneseq
    %v1484 = vshrl.u32 %v1483, 7
    %v1485 = vsub.s32 0, %v1484
    %v1486 = vrot.slane %v1482, %v1485
    %vm1487 = vcmask 883712
    %v1489 = vsel %vm1487, %v1467, 0
    %vm1491 = vcmask 1043456
    %v1493 = vsel %vm1491, %v1481, 0
    %1495 = vmatprep.subr.mxu0 0.0
    %1496 = vmatpush1.msra.mxu0 %v1468
    %1497 = vmatprep.subr.mxu0 0.0
    %1498 = vmatpush1.msra.mxu0 %v1469
    %1499 = vmatprep.subr.mxu0 0.0
    %1500 = vmatpush1.msra.mxu0 %v1470
    %1501 = vmatprep.subr.mxu0 0.0
    %1502 = vmatpush1.msra.mxu0 %v1471
    %1503 = vmatprep.subr.mxu0 0.0
    %1504 = vmatpush1.msra.mxu0 %v1472
    %1505 = vmatprep.subr.mxu0 0.0
    %1506 = vmatpush1.msra.mxu0 %v1473
    %1507 = vmatprep.subr.mxu0 0.0
    %1508 = vmatpush1.msra.mxu0 %v1474
    %1509 = vmatprep.subr.mxu0 0.0
    %1510 = vmatpush1.msra.mxu0 %v1475
    %1511 = vmatprep.subr.mxu0 0.0
    %1512 = vmatpush1.msra.mxu0 %v1476
    %1513 = vmatprep.subr.mxu0 0.0
    %1514 = vmatpush1.msra.mxu0 %v1477
    %1515 = vmatprep.subr.mxu0 0.0
    %1516 = vmatpush1.msra.mxu0 %v1478
    %1517 = vmatprep.subr.mxu0 0.0
    %1518 = vmatpush1.msra.mxu0 %v1479
    %1519 = vmatprep.subr.mxu0 0.0
    %1520 = vmatpush1.msra.mxu0 %v1480
    %1521 = vmatprep.subr.mxu0 0.0
    %1522 = vmatpush1.msra.mxu0 %v1493
    %1523 = vmatprep.subr.mxu0 0.0
    %1524 = vmatpush1.msra.mxu0 0.0
    %1525 = vmatprep.subr.mxu0 0.0
    %1526 = vmatpush1.msra.mxu0 0.0
    %1527 = vmatprep.subr.mxu0 0.0
    %1528 = vmatpush1.msra.mxu0 0.0
    %1529 = vmatprep.subr.mxu0 0.0
    %1530 = vmatpush1.msra.mxu0 0.0
    %1531 = vmatprep.subr.mxu0 0.0
    %1532 = vmatpush1.msra.mxu0 0.0
    %1533 = vmatprep.subr.mxu0 0.0
    %1534 = vmatpush1.msra.mxu0 0.0
    %1535 = vmatprep.subr.mxu0 0.0
    %1536 = vmatpush1.msra.mxu0 0.0
    %1537 = vmatprep.subr.mxu0 0.0
    %1538 = vmatpush1.msra.mxu0 0.0
    %1539 = vmatprep.subr.mxu0 0.0
    %1540 = vmatpush1.msra.mxu0 0.0
    %1541 = vmatprep.subr.mxu0 0.0
    %1542 = vmatpush1.msra.mxu0 0.0
    %1543 = vmatprep.subr.mxu0 0.0
    %1544 = vmatpush1.msra.mxu0 0.0
    %1545 = vmatprep.subr.mxu0 0.0
    %1546 = vmatpush1.msra.mxu0 0.0
    %1547 = vmatprep.subr.mxu0 0.0
    %1548 = vmatpush1.msra.mxu0 0.0
    %1549 = vmatprep.subr.mxu0 0.0
    %1550 = vmatpush1.msra.mxu0 0.0
    %1551 = vmatprep.subr.mxu0 0.0
    %1552 = vmatpush1.msra.mxu0 0.0
    %1553 = vmatprep.subr.mxu0 0.0
    %1554 = vmatpush1.msra.mxu0 0.0
    %1555 = vmatprep.subr.mxu0 0.0
    %1556 = vmatpush1.msra.mxu0 0.0
    %1557 = vmatprep.subr.mxu0 0.0
    %1558 = vmatpush1.msra.mxu0 0.0
    %1559 = vmatprep.mubr.f32.mxu0 0.0
    %1560 = vmatmul.mubr.f32.gmra.mrb[0].mxu0 %v1489
    %v1561 = vpop.f32.mrb[0].mxu0
    %v1562 = vadd.f32 %v1486, %v1561
    %v1563 = vpop.f32.mrb[0].mxu0
    %1564 = vdwg.mxu0
    %v1565 = vmax.f32 %v1562, 0.0
    %v1566 = vld [vmem:[%s2 + $0x70] sm:$0xff]
    %v1567 = vld [vmem:[%s2 + $0x78] sm:$0xf]
    %v1568 = vld [vmem:[%s2 + $0x7c] sm:$0x1]
    %v1569 = vlaneseq
    %v1570 = vshrl.u32 %v1569, 7
    %v1571 = vsub.s32 0, %v1570
    %v1572 = vrot.slane %v1568, %v1571
    %v1574 = vsel %vm1423, %v1565, 0
    %v1577 = vsel %vm1491, %v1567, 0
    %1579 = vmatprep.subr.mxu0 0.0
    %1580 = vmatpush1.msra.mxu0 %v1566
    %1581 = vmatprep.subr.mxu0 0.0
    %1582 = vmatpush1.msra.mxu0 %v1577
    %1583 = vmatprep.subr.mxu0 0.0
    %1584 = vmatpush1.msra.mxu0 0.0
    %1585 = vmatprep.subr.mxu0 0.0
    %1586 = vmatpush1.msra.mxu0 0.0
    %1587 = vmatprep.subr.mxu0 0.0
    %1588 = vmatpush1.msra.mxu0 0.0
    %1589 = vmatprep.subr.mxu0 0.0
    %1590 = vmatpush1.msra.mxu0 0.0
    %1591 = vmatprep.subr.mxu0 0.0
    %1592 = vmatpush1.msra.mxu0 0.0
    %1593 = vmatprep.subr.mxu0 0.0
    %1594 = vmatpush1.msra.mxu0 0.0
    %1595 = vmatprep.subr.mxu0 0.0
    %1596 = vmatpush1.msra.mxu0 0.0
    %1597 = vmatprep.subr.mxu0 0.0
    %1598 = vmatpush1.msra.mxu0 0.0
    %1599 = vmatprep.subr.mxu0 0.0
    %1600 = vmatpush1.msra.mxu0 0.0
    %1601 = vmatprep.subr.mxu0 0.0
    %1602 = vmatpush1.msra.mxu0 0.0
    %1603 = vmatprep.subr.mxu0 0.0
    %1604 = vmatpush1.msra.mxu0 0.0
    %1605 = vmatprep.subr.mxu0 0.0
    %1606 = vmatpush1.msra.mxu0 0.0
    %1607 = vmatprep.subr.mxu0 0.0
    %1608 = vmatpush1.msra.mxu0 0.0
    %1609 = vmatprep.subr.mxu0 0.0
    %1610 = vmatpush1.msra.mxu0 0.0
    %1611 = vmatprep.subr.mxu0 0.0
    %1612 = vmatpush1.msra.mxu0 0.0
    %1613 = vmatprep.subr.mxu0 0.0
    %1614 = vmatpush1.msra.mxu0 0.0
    %1615 = vmatprep.subr.mxu0 0.0
    %1616 = vmatpush1.msra.mxu0 0.0
    %1617 = vmatprep.subr.mxu0 0.0
    %1618 = vmatpush1.msra.mxu0 0.0
    %1619 = vmatprep.subr.mxu0 0.0
    %1620 = vmatpush1.msra.mxu0 0.0
    %1621 = vmatprep.subr.mxu0 0.0
    %1622 = vmatpush1.msra.mxu0 0.0
    %1623 = vmatprep.subr.mxu0 0.0
    %1624 = vmatpush1.msra.mxu0 0.0
    %1625 = vmatprep.subr.mxu0 0.0
    %1626 = vmatpush1.msra.mxu0 0.0
    %1627 = vmatprep.subr.mxu0 0.0
    %1628 = vmatpush1.msra.mxu0 0.0
    %1629 = vmatprep.subr.mxu0 0.0
    %1630 = vmatpush1.msra.mxu0 0.0
    %1631 = vmatprep.subr.mxu0 0.0
    %1632 = vmatpush1.msra.mxu0 0.0
    %1633 = vmatprep.subr.mxu0 0.0
    %1634 = vmatpush1.msra.mxu0 0.0
    %1635 = vmatprep.subr.mxu0 0.0
    %1636 = vmatpush1.msra.mxu0 0.0
    %1637 = vmatprep.subr.mxu0 0.0
    %1638 = vmatpush1.msra.mxu0 0.0
    %1639 = vmatprep.subr.mxu0 0.0
    %1640 = vmatpush1.msra.mxu0 0.0
    %1641 = vmatprep.subr.mxu0 0.0
    %1642 = vmatpush1.msra.mxu0 0.0
    %1643 = vmatprep.mubr.f32.mxu0 0.0
    %1644 = vmatmul.mubr.f32.gmra.mrb[0].mxu0 %v1574
    %v1645 = vpop.f32.mrb[0].mxu0
    %v1646 = vadd.f32 %v1572, %v1645
    %v1647 = vpop.f32.mrb[0].mxu0
    %1648 = vdwg.mxu0
    %vm1649 = vcmask 74752
    %v1650 = vsel %vm1649, %v1646, -inf
    %1651 = vmax.xlane.f32.xlu0 %v1650
    %v1652 = vpop.xlane.xlu0 %1651
    %v1653 = vsub.f32 %v1646, %v1652
    %v1654 = vmul.f32 %v1653, 1.442695
    %v1655 = vpow.pop %v1654
    %v1656 = vsel %vm1649, %v1655, 0.0
    %1657 = vadd.xlane.f32.xlu0 %v1656
    %v1658 = vpop.xlane.xlu0 %1657
    %v1659 = vrcp.pop %v1658
    %v1660 = vmul.f32 %v1655, %v1659
    %1661 = vst.msk [vmem:[#allocation5] sm:$0x3] %vm1649, %v1660
    // Predicated region
    $region18: #{tpu_custom_call.1} parent=1 // pred_check
      _
    $region19: #{tpu_custom_call.1} parent=1 // pred_check_branch
      %1663 = sbr.rel (0) target = $region21
    $region20: #{tpu_custom_call.1} parent=1 // pred_region
      %s1665 = ssub.s32 32, 32
      %1666 = vsyncadd [#allocation3], %s1665
      %s1668 = sshll.u32 [#allocation5], 4
      %s1669 = int_to_ptr.vmem [resolvable:$true] %s1668
      %1671 = dma.vmem_to_hbm [thread:$0]  %s1669, 32, %s3, [#allocation3]
    $region21: #{tpu_custom_call.1} parent=1 // pred_fallthru
      _
    // Predicated region
    $region22: #{tpu_custom_call.1} parent=1 // pred_check
      _
    $region23: #{tpu_custom_call.1} parent=1 // pred_check_branch
      %1673 = sbr.rel (0) target = $region25
    $region24: #{tpu_custom_call.1} parent=1 // pred_region
      %1674 = dma.done [#allocation3], 32
    $region25: #{tpu_custom_call.1} parent=1 // pred_fallthru
      _
    %1675 = vsyncpa [#allocation3], 1
    %1676 = vsyncpa [#allocation4], 1

</llo_original>
